<compile_context>
chip_gen: v7x
topology: tpu7x:2x2x1
jax: 0.10.0
libtpu: 0.0.40
codegen_flags: <defaults>
</compile_context>

<pallas_src>
from functools import partial

import jax
import jax.numpy as jnp
from jax.experimental import pallas as pl
from jax.experimental.pallas import tpu as pltpu

_KH = _KW = 3  # SimpleModule.conv kernel size


def _fused_kernel(x_ref, cw_ref, cb_ref, ws_ref, bs_ref, mask_ref, o_ref,
                  *, nb, cin, img_w, kh, kw):
    # x_ref   : (nb*cin, H*W)   flattened channel images, rows = (batch, channel)
    # cw_ref  : (kh*kw, 8, cin) per-tap composed conv weights (w2 @ w1), out-dim padded 4->8
    # cb_ref  : (8, 1)          composed conv bias (w2 @ b1), zero padded
    # ws_ref  : (3, 8, 8)       head weights in (out, in) layout; lin1 in-dim padded 4->8
    # bs_ref  : (3, 8, 1)       head biases
    # mask_ref: (1, nb*H*W)     0/1 mask of valid conv output positions (loose layout)
    # o_ref   : (nb, 8)
    lanes = x_ref.shape[-1]                 # H*W (= 256 here, multiple of 128)
    x2 = x_ref[...]                         # (nb*cin, lanes)

    # Fused conv1(3x3)+conv2(1x1): 9 tap matmuls.  In the "loose" H*W layout,
    # tap (dh, dw) of the VALID conv is a static lane rotation by dh*img_w+dw;
    # batch elements are packed side by side on the lane axis so each matmul
    # covers the whole batch.
    acc = jnp.zeros((8, nb * lanes), jnp.float32)
    t = 0
    for dh in range(kh):
        for dw in range(kw):
            s = dh * img_w + dw
            r = x2 if s == 0 else pltpu.roll(x2, lanes - s, axis=1)  # col j <- col j+s
            rhs = jnp.concatenate(                                   # (cin, nb*lanes)
                [r[b * cin:(b + 1) * cin, :] for b in range(nb)], axis=1)
            acc = acc + jnp.dot(cw_ref[t], rhs, preferred_element_type=jnp.float32)
            t += 1

    # bias + ReLU, then zero the invalid "loose" columns (safe: post-ReLU >= 0,
    # so a zero never beats the true max, which is itself >= 0).
    y = jnp.maximum(acc + cb_ref[...], 0.0) * mask_ref[...]          # (8, nb*lanes)

    # Global (adaptive 1x1) max pool per batch element: 128-aligned lane slices
    # -> plain unmasked lane reduces; result kept as (features, batch).
    pooled = jnp.concatenate(
        [jnp.max(y[:, b * lanes:(b + 1) * lanes], axis=1, keepdims=True)
         for b in range(nb)], axis=1)                                # (8, nb)

    # MLP head, (feature, batch) orientation end to end.
    h = jnp.dot(ws_ref[0], pooled, preferred_element_type=jnp.float32) + bs_ref[0]
    # UntraceableSubModule: if torch.max(x) < 0: x = x + 1   (full-batch max)
    h = jnp.where(jnp.max(h) < 0.0, h + 1.0, h)
    h = jnp.maximum(
        jnp.dot(ws_ref[1], h, preferred_element_type=jnp.float32) + bs_ref[1], 0.0)
    out = jnp.dot(ws_ref[2], h, preferred_element_type=jnp.float32) + bs_ref[2]
    o_ref[...] = out.T                                               # (nb, 8)


def pack_params(params, x_shape):
    """Pack / compose module parameters ONCE (outside the per-call path)."""
    n, c_in, h, w = x_shape
    kh, kw = params["conv1_w"].shape[2], params["conv1_w"].shape[3]
    c_mid = params["conv1_w"].shape[0]
    c_out = params["conv2_w"].shape[0]

    # conv2(1x1, no bias) o conv1(3x3): exact because ReLU comes after conv2.
    w2 = params["conv2_w"].reshape(c_out, c_mid)
    w_eff = jnp.einsum("om,mcij->ocij", w2, params["conv1_w"])       # (4, c_in, 3, 3)
    b_eff = w2 @ params["conv1_b"]                                   # (4,)

    # Per-tap weights: cw[t, o, c] = w_eff[o, c, dh, dw] with t = dh*kw + dw.
    cw = jnp.transpose(w_eff, (2, 3, 0, 1)).reshape(kh * kw, c_out, c_in)
    cw = jnp.zeros((kh * kw, 8, c_in), jnp.float32).at[:, :c_out, :].set(cw)
    cb = jnp.zeros((8, 1), jnp.float32).at[:c_out, 0].set(b_eff)

    # Head weights in (out, in) layout; lin1 in-dim padded 4->8 with zero cols
    # (pooled rows 4..7 are exactly zero, so the padded product is exact).
    w1h = jnp.zeros((8, 8), jnp.float32).at[:, :c_out].set(params["lin1_w"])
    ws = jnp.stack([w1h, params["lin2_w"], params["lin3_w"]])                  # (3, 8, 8)
    bs = jnp.stack([params["lin1_b"], params["lin2_b"], params["lin3_b"]])[:, :, None]

    # 0/1 mask of valid conv output positions in the loose (H*W) layout,
    # tiled over the batch blocks on the lane axis.
    oh = jnp.arange(h)[:, None]
    ow = jnp.arange(w)[None, :]
    mask = ((oh <= h - kh) & (ow <= w - kw)).astype(jnp.float32).reshape(1, h * w)
    mask = jnp.tile(mask, (1, n))                                    # (1, n*h*w)

    return {"cw": cw, "cb": cb, "ws": ws, "bs": bs, "mask": mask}


def untraceable_simple_module(x, packed):
    n, c, h, w = x.shape
    x2 = x.reshape(n * c, h * w)          # contiguous -> free (bitcast) reshape
    kernel = partial(_fused_kernel, nb=n, cin=c, img_w=w, kh=_KH, kw=_KW)
    return pl.pallas_call(
        kernel,
        out_shape=jax.ShapeDtypeStruct((n, 8), jnp.float32),
        in_specs=[pl.BlockSpec(memory_space=pltpu.MemorySpace.VMEM)] * 6,
        out_specs=pl.BlockSpec(memory_space=pltpu.MemorySpace.VMEM),
        # Grid-less single call: whole problem is a few KB of VMEM at N=2.
        # (vmem_limit_bytes / batch grid only become relevant if N scales up.)
    )(x2, packed["cw"], packed["cb"], packed["ws"], packed["bs"], packed["mask"])


def _reference(x, params):
    dn = ("NCHW", "OIHW", "NCHW")
    y = jax.lax.conv_general_dilated(x, params["conv1_w"], (1, 1), "VALID",
                                     dimension_numbers=dn)
    y = y + params["conv1_b"].reshape(1, 4, 1, 1)
    y = jax.lax.conv_general_dilated(y, params["conv2_w"], (1, 1), "VALID",
                                     dimension_numbers=dn)
    y = jnp.maximum(y, 0.0)
    y = jnp.max(y, axis=(2, 3))                          # AdaptiveMaxPool2d((1,1)) + flatten
    y = y @ params["lin1_w"].T + params["lin1_b"]        # SimpleModule.linear
    y = jnp.where(jnp.max(y) < 0.0, y + 1.0, y)          # untraceable branch
    y = jnp.maximum(y @ params["lin2_w"].T + params["lin2_b"], 0.0)
    y = y @ params["lin3_w"].T + params["lin3_b"]
    return y


def _init_params():
    keys = jax.random.split(jax.random.PRNGKey(42), 9)
    s = 0.1
    return {
        "conv1_w": jax.random.normal(keys[0], (4, 2, 3, 3), jnp.float32) * s,
        "conv1_b": jax.random.normal(keys[1], (4,), jnp.float32) * s,
        "conv2_w": jax.random.normal(keys[2], (4, 4, 1, 1), jnp.float32) * s,
        "lin1_w": jax.random.normal(keys[3], (8, 4), jnp.float32) * s,   # (out, in) like torch
        "lin1_b": jax.random.normal(keys[4], (8,), jnp.float32) * s,
        "lin2_w": jax.random.normal(keys[5], (8, 8), jnp.float32) * s,
        "lin2_b": jax.random.normal(keys[6], (8,), jnp.float32) * s,
        "lin3_w": jax.random.normal(keys[7], (8, 8), jnp.float32) * s,
        "lin3_b": jax.random.normal(keys[8], (8,), jnp.float32) * s,
    }


if __name__ == "__main__":
    params = _init_params()
    x = jax.random.normal(jax.random.PRNGKey(0), (2, 2, 16, 16), jnp.float32)

    packed = pack_params(params, x.shape)      # hoisted: once per model, not per call
    fwd = jax.jit(untraceable_simple_module)

    out = jax.block_until_ready(fwd(x, packed))
    ref = _reference(x, params)

    assert out.shape == (2, 8)
    assert jnp.allclose(out, ref, atol=1e-4, rtol=1e-4), (out, ref)
    print("KERNEL_OK")
</pallas_src>

<mosaic_0001>
module attributes {stable_mosaic.version = 11 : i64} {
  func.func @_fused_kernel(%arg0: memref<4x256xf32, #tpu.memory_space<vmem>>, %arg1: memref<9x8x2xf32, #tpu.memory_space<vmem>>, %arg2: memref<8x1xf32, #tpu.memory_space<vmem>>, %arg3: memref<3x8x8xf32, #tpu.memory_space<vmem>>, %arg4: memref<3x8x1xf32, #tpu.memory_space<vmem>>, %arg5: memref<1x512xf32, #tpu.memory_space<vmem>>, %arg6: memref<2x8xf32, #tpu.memory_space<vmem>>) attributes {dimension_semantics = [], scalar_prefetch = 0 : i64, scratch_operands = 0 : i64, tpu.core_type = #tpu.core_type<tc>} {
    %c0 = arith.constant 0 : index
    %c0_0 = arith.constant 0 : index
    %0 = vector.load %arg0[%c0, %c0_0] : memref<4x256xf32, #tpu.memory_space<vmem>>, vector<4x256xf32>
    %cst = arith.constant 0.000000e+00 : f32
    %1 = vector.broadcast %cst : f32 to vector<8x512xf32>
    %2 = vector.extract_strided_slice %0 {offsets = [0, 0], sizes = [2, 256], strides = [1, 1]} : vector<4x256xf32> to vector<2x256xf32>
    %3 = vector.extract_strided_slice %0 {offsets = [2, 0], sizes = [2, 256], strides = [1, 1]} : vector<4x256xf32> to vector<2x256xf32>
    %4 = tpu.concatenate %2, %3 in 1 : vector<2x256xf32>, vector<2x256xf32> -> vector<2x512xf32>
    %c0_1 = arith.constant 0 : index
    %c0_2 = arith.constant 0 : index
    %c0_3 = arith.constant 0 : index
    %5 = vector.load %arg1[%c0_1, %c0_2, %c0_3] : memref<9x8x2xf32, #tpu.memory_space<vmem>>, vector<1x8x2xf32>
    %6 = vector.shape_cast %5 : vector<1x8x2xf32> to vector<8x2xf32>
    %cst_4 = arith.constant dense<0.000000e+00> : vector<8x512xf32>
    %7 = tpu.matmul %6, %4, %cst_4 {dimension_numbers = #tpu.dot_dimension_numbers<[1], [0], [0], [1], [0, 0, 1, 1], [], []>} : vector<8x2xf32>, vector<2x512xf32>, vector<8x512xf32> -> vector<8x512xf32>
    %8 = arith.addf %1, %7 : vector<8x512xf32>
    %c255_i32 = arith.constant 255 : i32
    %9 = tpu.dynamic_rotate %0 by %c255_i32 dim 1 : vector<4x256xf32>, i32 -> vector<4x256xf32>
    %10 = vector.extract_strided_slice %9 {offsets = [0, 0], sizes = [2, 256], strides = [1, 1]} : vector<4x256xf32> to vector<2x256xf32>
    %11 = vector.extract_strided_slice %9 {offsets = [2, 0], sizes = [2, 256], strides = [1, 1]} : vector<4x256xf32> to vector<2x256xf32>
    %12 = tpu.concatenate %10, %11 in 1 : vector<2x256xf32>, vector<2x256xf32> -> vector<2x512xf32>
    %c1 = arith.constant 1 : index
    %c0_5 = arith.constant 0 : index
    %c0_6 = arith.constant 0 : index
    %13 = vector.load %arg1[%c1, %c0_5, %c0_6] : memref<9x8x2xf32, #tpu.memory_space<vmem>>, vector<1x8x2xf32>
    %14 = vector.shape_cast %13 : vector<1x8x2xf32> to vector<8x2xf32>
    %cst_7 = arith.constant dense<0.000000e+00> : vector<8x512xf32>
    %15 = tpu.matmul %14, %12, %cst_7 {dimension_numbers = #tpu.dot_dimension_numbers<[1], [0], [0], [1], [0, 0, 1, 1], [], []>} : vector<8x2xf32>, vector<2x512xf32>, vector<8x512xf32> -> vector<8x512xf32>
    %16 = arith.addf %8, %15 : vector<8x512xf32>
    %c254_i32 = arith.constant 254 : i32
    %17 = tpu.dynamic_rotate %0 by %c254_i32 dim 1 : vector<4x256xf32>, i32 -> vector<4x256xf32>
    %18 = vector.extract_strided_slice %17 {offsets = [0, 0], sizes = [2, 256], strides = [1, 1]} : vector<4x256xf32> to vector<2x256xf32>
    %19 = vector.extract_strided_slice %17 {offsets = [2, 0], sizes = [2, 256], strides = [1, 1]} : vector<4x256xf32> to vector<2x256xf32>
    %20 = tpu.concatenate %18, %19 in 1 : vector<2x256xf32>, vector<2x256xf32> -> vector<2x512xf32>
    %c2 = arith.constant 2 : index
    %c0_8 = arith.constant 0 : index
    %c0_9 = arith.constant 0 : index
    %21 = vector.load %arg1[%c2, %c0_8, %c0_9] : memref<9x8x2xf32, #tpu.memory_space<vmem>>, vector<1x8x2xf32>
    %22 = vector.shape_cast %21 : vector<1x8x2xf32> to vector<8x2xf32>
    %cst_10 = arith.constant dense<0.000000e+00> : vector<8x512xf32>
    %23 = tpu.matmul %22, %20, %cst_10 {dimension_numbers = #tpu.dot_dimension_numbers<[1], [0], [0], [1], [0, 0, 1, 1], [], []>} : vector<8x2xf32>, vector<2x512xf32>, vector<8x512xf32> -> vector<8x512xf32>
    %24 = arith.addf %16, %23 : vector<8x512xf32>
    %c240_i32 = arith.constant 240 : i32
    %25 = tpu.dynamic_rotate %0 by %c240_i32 dim 1 : vector<4x256xf32>, i32 -> vector<4x256xf32>
    %26 = vector.extract_strided_slice %25 {offsets = [0, 0], sizes = [2, 256], strides = [1, 1]} : vector<4x256xf32> to vector<2x256xf32>
    %27 = vector.extract_strided_slice %25 {offsets = [2, 0], sizes = [2, 256], strides = [1, 1]} : vector<4x256xf32> to vector<2x256xf32>
    %28 = tpu.concatenate %26, %27 in 1 : vector<2x256xf32>, vector<2x256xf32> -> vector<2x512xf32>
    %c3 = arith.constant 3 : index
    %c0_11 = arith.constant 0 : index
    %c0_12 = arith.constant 0 : index
    %29 = vector.load %arg1[%c3, %c0_11, %c0_12] : memref<9x8x2xf32, #tpu.memory_space<vmem>>, vector<1x8x2xf32>
    %30 = vector.shape_cast %29 : vector<1x8x2xf32> to vector<8x2xf32>
    %cst_13 = arith.constant dense<0.000000e+00> : vector<8x512xf32>
    %31 = tpu.matmul %30, %28, %cst_13 {dimension_numbers = #tpu.dot_dimension_numbers<[1], [0], [0], [1], [0, 0, 1, 1], [], []>} : vector<8x2xf32>, vector<2x512xf32>, vector<8x512xf32> -> vector<8x512xf32>
    %32 = arith.addf %24, %31 : vector<8x512xf32>
    %c239_i32 = arith.constant 239 : i32
    %33 = tpu.dynamic_rotate %0 by %c239_i32 dim 1 : vector<4x256xf32>, i32 -> vector<4x256xf32>
    %34 = vector.extract_strided_slice %33 {offsets = [0, 0], sizes = [2, 256], strides = [1, 1]} : vector<4x256xf32> to vector<2x256xf32>
    %35 = vector.extract_strided_slice %33 {offsets = [2, 0], sizes = [2, 256], strides = [1, 1]} : vector<4x256xf32> to vector<2x256xf32>
    %36 = tpu.concatenate %34, %35 in 1 : vector<2x256xf32>, vector<2x256xf32> -> vector<2x512xf32>
    %c4 = arith.constant 4 : index
    %c0_14 = arith.constant 0 : index
    %c0_15 = arith.constant 0 : index
    %37 = vector.load %arg1[%c4, %c0_14, %c0_15] : memref<9x8x2xf32, #tpu.memory_space<vmem>>, vector<1x8x2xf32>
    %38 = vector.shape_cast %37 : vector<1x8x2xf32> to vector<8x2xf32>
    %cst_16 = arith.constant dense<0.000000e+00> : vector<8x512xf32>
    %39 = tpu.matmul %38, %36, %cst_16 {dimension_numbers = #tpu.dot_dimension_numbers<[1], [0], [0], [1], [0, 0, 1, 1], [], []>} : vector<8x2xf32>, vector<2x512xf32>, vector<8x512xf32> -> vector<8x512xf32>
    %40 = arith.addf %32, %39 : vector<8x512xf32>
    %c238_i32 = arith.constant 238 : i32
    %41 = tpu.dynamic_rotate %0 by %c238_i32 dim 1 : vector<4x256xf32>, i32 -> vector<4x256xf32>
    %42 = vector.extract_strided_slice %41 {offsets = [0, 0], sizes = [2, 256], strides = [1, 1]} : vector<4x256xf32> to vector<2x256xf32>
    %43 = vector.extract_strided_slice %41 {offsets = [2, 0], sizes = [2, 256], strides = [1, 1]} : vector<4x256xf32> to vector<2x256xf32>
    %44 = tpu.concatenate %42, %43 in 1 : vector<2x256xf32>, vector<2x256xf32> -> vector<2x512xf32>
    %c5 = arith.constant 5 : index
    %c0_17 = arith.constant 0 : index
    %c0_18 = arith.constant 0 : index
    %45 = vector.load %arg1[%c5, %c0_17, %c0_18] : memref<9x8x2xf32, #tpu.memory_space<vmem>>, vector<1x8x2xf32>
    %46 = vector.shape_cast %45 : vector<1x8x2xf32> to vector<8x2xf32>
    %cst_19 = arith.constant dense<0.000000e+00> : vector<8x512xf32>
    %47 = tpu.matmul %46, %44, %cst_19 {dimension_numbers = #tpu.dot_dimension_numbers<[1], [0], [0], [1], [0, 0, 1, 1], [], []>} : vector<8x2xf32>, vector<2x512xf32>, vector<8x512xf32> -> vector<8x512xf32>
    %48 = arith.addf %40, %47 : vector<8x512xf32>
    %c224_i32 = arith.constant 224 : i32
    %49 = tpu.dynamic_rotate %0 by %c224_i32 dim 1 : vector<4x256xf32>, i32 -> vector<4x256xf32>
    %50 = vector.extract_strided_slice %49 {offsets = [0, 0], sizes = [2, 256], strides = [1, 1]} : vector<4x256xf32> to vector<2x256xf32>
    %51 = vector.extract_strided_slice %49 {offsets = [2, 0], sizes = [2, 256], strides = [1, 1]} : vector<4x256xf32> to vector<2x256xf32>
    %52 = tpu.concatenate %50, %51 in 1 : vector<2x256xf32>, vector<2x256xf32> -> vector<2x512xf32>
    %c6 = arith.constant 6 : index
    %c0_20 = arith.constant 0 : index
    %c0_21 = arith.constant 0 : index
    %53 = vector.load %arg1[%c6, %c0_20, %c0_21] : memref<9x8x2xf32, #tpu.memory_space<vmem>>, vector<1x8x2xf32>
    %54 = vector.shape_cast %53 : vector<1x8x2xf32> to vector<8x2xf32>
    %cst_22 = arith.constant dense<0.000000e+00> : vector<8x512xf32>
    %55 = tpu.matmul %54, %52, %cst_22 {dimension_numbers = #tpu.dot_dimension_numbers<[1], [0], [0], [1], [0, 0, 1, 1], [], []>} : vector<8x2xf32>, vector<2x512xf32>, vector<8x512xf32> -> vector<8x512xf32>
    %56 = arith.addf %48, %55 : vector<8x512xf32>
    %c223_i32 = arith.constant 223 : i32
    %57 = tpu.dynamic_rotate %0 by %c223_i32 dim 1 : vector<4x256xf32>, i32 -> vector<4x256xf32>
    %58 = vector.extract_strided_slice %57 {offsets = [0, 0], sizes = [2, 256], strides = [1, 1]} : vector<4x256xf32> to vector<2x256xf32>
    %59 = vector.extract_strided_slice %57 {offsets = [2, 0], sizes = [2, 256], strides = [1, 1]} : vector<4x256xf32> to vector<2x256xf32>
    %60 = tpu.concatenate %58, %59 in 1 : vector<2x256xf32>, vector<2x256xf32> -> vector<2x512xf32>
    %c7 = arith.constant 7 : index
    %c0_23 = arith.constant 0 : index
    %c0_24 = arith.constant 0 : index
    %61 = vector.load %arg1[%c7, %c0_23, %c0_24] : memref<9x8x2xf32, #tpu.memory_space<vmem>>, vector<1x8x2xf32>
    %62 = vector.shape_cast %61 : vector<1x8x2xf32> to vector<8x2xf32>
    %cst_25 = arith.constant dense<0.000000e+00> : vector<8x512xf32>
    %63 = tpu.matmul %62, %60, %cst_25 {dimension_numbers = #tpu.dot_dimension_numbers<[1], [0], [0], [1], [0, 0, 1, 1], [], []>} : vector<8x2xf32>, vector<2x512xf32>, vector<8x512xf32> -> vector<8x512xf32>
    %64 = arith.addf %56, %63 : vector<8x512xf32>
    %c222_i32 = arith.constant 222 : i32
    %65 = tpu.dynamic_rotate %0 by %c222_i32 dim 1 : vector<4x256xf32>, i32 -> vector<4x256xf32>
    %66 = vector.extract_strided_slice %65 {offsets = [0, 0], sizes = [2, 256], strides = [1, 1]} : vector<4x256xf32> to vector<2x256xf32>
    %67 = vector.extract_strided_slice %65 {offsets = [2, 0], sizes = [2, 256], strides = [1, 1]} : vector<4x256xf32> to vector<2x256xf32>
    %68 = tpu.concatenate %66, %67 in 1 : vector<2x256xf32>, vector<2x256xf32> -> vector<2x512xf32>
    %c8 = arith.constant 8 : index
    %c0_26 = arith.constant 0 : index
    %c0_27 = arith.constant 0 : index
    %69 = vector.load %arg1[%c8, %c0_26, %c0_27] : memref<9x8x2xf32, #tpu.memory_space<vmem>>, vector<1x8x2xf32>
    %70 = vector.shape_cast %69 : vector<1x8x2xf32> to vector<8x2xf32>
    %cst_28 = arith.constant dense<0.000000e+00> : vector<8x512xf32>
    %71 = tpu.matmul %70, %68, %cst_28 {dimension_numbers = #tpu.dot_dimension_numbers<[1], [0], [0], [1], [0, 0, 1, 1], [], []>} : vector<8x2xf32>, vector<2x512xf32>, vector<8x512xf32> -> vector<8x512xf32>
    %72 = arith.addf %64, %71 : vector<8x512xf32>
    %c0_29 = arith.constant 0 : index
    %c0_30 = arith.constant 0 : index
    %73 = vector.load %arg2[%c0_29, %c0_30] : memref<8x1xf32, #tpu.memory_space<vmem>>, vector<8x1xf32>
    %74 = vector.broadcast %73 : vector<8x1xf32> to vector<8x512xf32>
    %75 = arith.addf %72, %74 : vector<8x512xf32>
    %cst_31 = arith.constant 0.000000e+00 : f32
    %76 = vector.broadcast %cst_31 : f32 to vector<8x512xf32>
    %77 = arith.maximumf %75, %76 : vector<8x512xf32>
    %c0_32 = arith.constant 0 : index
    %c0_33 = arith.constant 0 : index
    %78 = vector.load %arg5[%c0_32, %c0_33] : memref<1x512xf32, #tpu.memory_space<vmem>>, vector<1x512xf32>
    %79 = vector.broadcast %78 : vector<1x512xf32> to vector<8x512xf32>
    %80 = arith.mulf %77, %79 : vector<8x512xf32>
    %81 = vector.extract_strided_slice %80 {offsets = [0, 0], sizes = [8, 256], strides = [1, 1]} : vector<8x512xf32> to vector<8x256xf32>
    %cst_34 = arith.constant dense<0xFF800000> : vector<8xf32>
    %82 = vector.multi_reduction <maximumf>, %81, %cst_34 [1] : vector<8x256xf32> to vector<8xf32>
    %83 = vector.shape_cast %82 : vector<8xf32> to vector<8x1xf32>
    %84 = vector.extract_strided_slice %80 {offsets = [0, 256], sizes = [8, 256], strides = [1, 1]} : vector<8x512xf32> to vector<8x256xf32>
    %cst_35 = arith.constant dense<0xFF800000> : vector<8xf32>
    %85 = vector.multi_reduction <maximumf>, %84, %cst_35 [1] : vector<8x256xf32> to vector<8xf32>
    %86 = vector.shape_cast %85 : vector<8xf32> to vector<8x1xf32>
    %87 = tpu.concatenate %83, %86 in 1 : vector<8x1xf32>, vector<8x1xf32> -> vector<8x2xf32>
    %c0_36 = arith.constant 0 : index
    %c0_37 = arith.constant 0 : index
    %c0_38 = arith.constant 0 : index
    %88 = vector.load %arg3[%c0_36, %c0_37, %c0_38] : memref<3x8x8xf32, #tpu.memory_space<vmem>>, vector<1x8x8xf32>
    %89 = vector.shape_cast %88 : vector<1x8x8xf32> to vector<8x8xf32>
    %cst_39 = arith.constant dense<0.000000e+00> : vector<8x2xf32>
    %90 = tpu.matmul %89, %87, %cst_39 {dimension_numbers = #tpu.dot_dimension_numbers<[1], [0], [0], [1], [0, 0, 1, 1], [], []>} : vector<8x8xf32>, vector<8x2xf32>, vector<8x2xf32> -> vector<8x2xf32>
    %c0_40 = arith.constant 0 : index
    %c0_41 = arith.constant 0 : index
    %c0_42 = arith.constant 0 : index
    %91 = vector.load %arg4[%c0_40, %c0_41, %c0_42] : memref<3x8x1xf32, #tpu.memory_space<vmem>>, vector<1x8x1xf32>
    %92 = vector.shape_cast %91 : vector<1x8x1xf32> to vector<8x1xf32>
    %93 = vector.broadcast %92 : vector<8x1xf32> to vector<8x2xf32>
    %94 = arith.addf %90, %93 : vector<8x2xf32>
    %95 = vector.shape_cast %94 : vector<8x2xf32> to vector<1x8x2xf32>
    %cst_43 = arith.constant dense<0xFF800000> : vector<1xf32>
    %96 = vector.multi_reduction <maximumf>, %95, %cst_43 [1, 2] : vector<1x8x2xf32> to vector<1xf32>
    %97 = vector.shape_cast %96 : vector<1xf32> to vector<1x1x1xf32>
    %98 = vector.extract %97[0, 0, 0] : f32 from vector<1x1x1xf32>
    %cst_44 = arith.constant 0.000000e+00 : f32
    %99 = arith.cmpf olt, %98, %cst_44 : f32
    %cst_45 = arith.constant 1.000000e+00 : f32
    %100 = vector.broadcast %cst_45 : f32 to vector<8x2xf32>
    %101 = arith.addf %94, %100 : vector<8x2xf32>
    %102 = arith.select %99, %101, %94 : vector<8x2xf32>
    %c1_46 = arith.constant 1 : index
    %c0_47 = arith.constant 0 : index
    %c0_48 = arith.constant 0 : index
    %103 = vector.load %arg3[%c1_46, %c0_47, %c0_48] : memref<3x8x8xf32, #tpu.memory_space<vmem>>, vector<1x8x8xf32>
    %104 = vector.shape_cast %103 : vector<1x8x8xf32> to vector<8x8xf32>
    %cst_49 = arith.constant dense<0.000000e+00> : vector<8x2xf32>
    %105 = tpu.matmul %104, %102, %cst_49 {dimension_numbers = #tpu.dot_dimension_numbers<[1], [0], [0], [1], [0, 0, 1, 1], [], []>} : vector<8x8xf32>, vector<8x2xf32>, vector<8x2xf32> -> vector<8x2xf32>
    %c1_50 = arith.constant 1 : index
    %c0_51 = arith.constant 0 : index
    %c0_52 = arith.constant 0 : index
    %106 = vector.load %arg4[%c1_50, %c0_51, %c0_52] : memref<3x8x1xf32, #tpu.memory_space<vmem>>, vector<1x8x1xf32>
    %107 = vector.shape_cast %106 : vector<1x8x1xf32> to vector<8x1xf32>
    %108 = vector.broadcast %107 : vector<8x1xf32> to vector<8x2xf32>
    %109 = arith.addf %105, %108 : vector<8x2xf32>
    %cst_53 = arith.constant 0.000000e+00 : f32
    %110 = vector.broadcast %cst_53 : f32 to vector<8x2xf32>
    %111 = arith.maximumf %109, %110 : vector<8x2xf32>
    %c2_54 = arith.constant 2 : index
    %c0_55 = arith.constant 0 : index
    %c0_56 = arith.constant 0 : index
    %112 = vector.load %arg3[%c2_54, %c0_55, %c0_56] : memref<3x8x8xf32, #tpu.memory_space<vmem>>, vector<1x8x8xf32>
    %113 = vector.shape_cast %112 : vector<1x8x8xf32> to vector<8x8xf32>
    %cst_57 = arith.constant dense<0.000000e+00> : vector<8x2xf32>
    %114 = tpu.matmul %113, %111, %cst_57 {dimension_numbers = #tpu.dot_dimension_numbers<[1], [0], [0], [1], [0, 0, 1, 1], [], []>} : vector<8x8xf32>, vector<8x2xf32>, vector<8x2xf32> -> vector<8x2xf32>
    %c2_58 = arith.constant 2 : index
    %c0_59 = arith.constant 0 : index
    %c0_60 = arith.constant 0 : index
    %115 = vector.load %arg4[%c2_58, %c0_59, %c0_60] : memref<3x8x1xf32, #tpu.memory_space<vmem>>, vector<1x8x1xf32>
    %116 = vector.shape_cast %115 : vector<1x8x1xf32> to vector<8x1xf32>
    %117 = vector.broadcast %116 : vector<8x1xf32> to vector<8x2xf32>
    %118 = arith.addf %114, %117 : vector<8x2xf32>
    %119 = tpu.transpose %118, [1, 0] : vector<8x2xf32> -> vector<2x8xf32>
    %c0_61 = arith.constant 0 : index
    %c0_62 = arith.constant 0 : index
    %120 = vector.load %arg6[%c0_61, %c0_62] : memref<2x8xf32, #tpu.memory_space<vmem>>, vector<2x8xf32>
    tpu.vector_store %arg6[%c0_61, %c0_62], %119 {strides = array<i32>} : memref<2x8xf32, #tpu.memory_space<vmem>>, vector<2x8xf32>,
    return
  }
}

</mosaic_0001>

<llo_original>
// kernel: untraceable_simple_module.1
$region0: #{untraceable_simple_module.1}
  #allocation0 [shape = 'u32[]', space=smem, size = 0x4, offset = 0x4, fixed_abs, tag = 'smem constant byte address 0x4 - core index']
  #allocation1 [shape = 'u32[144,128]{1,0:T(1,128)}', space=vmem, size = 0x12000, scoped, tag = 'internal scratch']
  %s0 = inlined_call_operand.vmem [shape: f32[4,256], index: 0, kind: input, shape index: {}]
  %s1 = inlined_call_operand.vmem [shape: f32[9,8,2], index: 1, kind: input, shape index: {}]
  %s2 = inlined_call_operand.vmem [shape: f32[8,1], index: 2, kind: input, shape index: {}]
  %s3 = inlined_call_operand.vmem [shape: f32[3,8,8], index: 3, kind: input, shape index: {}]
  %s4 = inlined_call_operand.vmem [shape: f32[3,8,1], index: 4, kind: input, shape index: {}]
  %s5 = inlined_call_operand.vmem [shape: f32[1,512], index: 5, kind: input, shape index: {}]
  %s6 = inlined_call_operand.hbm [shape: f32[2,8], index: 6, kind: output, shape index: {}]
  %s7 = sld [smem:[#allocation0]]
  $region34: #{untraceable_simple_module.1} parent=0
    _
  %s9 = ssub.s32 1, %s7
  %s10 = scalar_select 0, %s9, %s7
  $region1: #{untraceable_simple_module.1} parent=0
    #allocation2 [shape = 'u8[1024]{0}', space=vmem, size = 0x400, scoped, tag = 'output window, operand 0, single buffered']
    #allocation3 [shape = 's32[1]{0}', space=sflag, size = 0x4, scoped, tag = 'scoped memory for untraceable_simple_module.1']
    %11 = vsyncpa [#allocation3], 0
    // Predicated region
    $region2: #{untraceable_simple_module.1} parent=1 // pred_check
      _
    $region3: #{untraceable_simple_module.1} parent=1 // pred_check_branch
      %13 = sbr.rel (0) target = $region5
    $region4: #{untraceable_simple_module.1} parent=1 // pred_region
      _
    $region5: #{untraceable_simple_module.1} parent=1 // pred_fallthru
      _
    // Predicated region
    $region6: #{untraceable_simple_module.1} parent=1 // pred_check
      _
    $region7: #{untraceable_simple_module.1} parent=1 // pred_check_branch
      %15 = sbr.rel (0) target = $region9
    $region8: #{untraceable_simple_module.1} parent=1 // pred_region
      _
    $region9: #{untraceable_simple_module.1} parent=1 // pred_fallthru
      _
    // Predicated region
    $region10: #{untraceable_simple_module.1} parent=1 // pred_check
      _
    $region11: #{untraceable_simple_module.1} parent=1 // pred_check_branch
      %17 = sbr.rel (0) target = $region13
    $region12: #{untraceable_simple_module.1} parent=1 // pred_region
      _
    $region13: #{untraceable_simple_module.1} parent=1 // pred_fallthru
      _
    // Predicated region
    $region14: #{untraceable_simple_module.1} parent=1 // pred_check
      _
    $region15: #{untraceable_simple_module.1} parent=1 // pred_check_branch
      %19 = sbr.rel (0) target = $region17
    $region16: #{untraceable_simple_module.1} parent=1 // pred_region
      _
    $region17: #{untraceable_simple_module.1} parent=1 // pred_fallthru
      _
    // Predicated region
    $region18: #{untraceable_simple_module.1} parent=1 // pred_check
      _
    $region19: #{untraceable_simple_module.1} parent=1 // pred_check_branch
      %21 = sbr.rel (0) target = $region21
    $region20: #{untraceable_simple_module.1} parent=1 // pred_region
      _
    $region21: #{untraceable_simple_module.1} parent=1 // pred_fallthru
      _
    // Predicated region
    $region22: #{untraceable_simple_module.1} parent=1 // pred_check
      _
    $region23: #{untraceable_simple_module.1} parent=1 // pred_check_branch
      %23 = sbr.rel (0) target = $region25
    $region24: #{untraceable_simple_module.1} parent=1 // pred_region
      _
    $region25: #{untraceable_simple_module.1} parent=1 // pred_fallthru
      _
    %v24 = vld [vmem:[%s0] sm:$0xff]
    %v26 = vcombine.high %v24, %v24
    %v27 = vrot.slane %v24, 2
    %v28 = vrot.slane %v26, 2
    %v29 = vld [vmem:[%s1] sm:$0xff]
    %31 = vrot.lane.b32.xlu0 %v24, 127
    %v32 = vpop.permute.xlu0 %31
    %33 = vrot.lane.b32.xlu0 %v26, 127
    %v34 = vpop.permute.xlu0 %33
    %v35 = vlaneseq
    %v36 = vand.u32 %v35, 127
    %vm37 = vcmp.lt.s32.totalorder %v36, 127
    %v38 = vsel %vm37, %v32, %v34
    %v39 = vsel %vm37, %v34, %v32
    %v42 = vrot.slane %v38, 2
    %v43 = vrot.slane %v39, 2
    %s44 = scalar_lea.vmem %s1, 8
    %v45 = vld [vmem:[%s44] sm:$0xff]
    %vm46 = vcmask 15360
    %v48 = vsel %vm46, %v45, 0
    %vm50 = vcmask 1041408
    %v51 = vsel %vm50, %v38, 0
    %v53 = vsel %vm50, %v39, 0
    %v55 = vsel %vm50, %v42, 0
    %v57 = vsel %vm50, %v43, 0
    %59 = vmatprep.subr.mxu0 %v53
    %60 = vmatpush1.msra.mxu0 %v51
    %61 = vmatprep.subr.mxu0 0.0
    %62 = vmatpush1.msra.mxu0 0.0
    %63 = vmatprep.subr.mxu0 0.0
    %64 = vmatpush1.msra.mxu0 0.0
    %65 = vmatprep.subr.mxu0 0.0
    %66 = vmatpush1.msra.mxu0 0.0
    %67 = vmatprep.subr.mxu0 0.0
    %68 = vmatpush1.msra.mxu0 0.0
    %69 = vmatprep.subr.mxu0 0.0
    %70 = vmatpush1.msra.mxu0 0.0
    %71 = vmatprep.subr.mxu0 0.0
    %72 = vmatpush1.msra.mxu0 0.0
    %73 = vmatprep.subr.mxu0 0.0
    %74 = vmatpush1.msra.mxu0 0.0
    %75 = vmatprep.subr.mxu0 0.0
    %76 = vmatpush1.msra.mxu0 0.0
    %77 = vmatprep.subr.mxu0 0.0
    %78 = vmatpush1.msra.mxu0 0.0
    %79 = vmatprep.subr.mxu0 0.0
    %80 = vmatpush1.msra.mxu0 0.0
    %81 = vmatprep.subr.mxu0 0.0
    %82 = vmatpush1.msra.mxu0 0.0
    %83 = vmatprep.subr.mxu0 0.0
    %84 = vmatpush1.msra.mxu0 0.0
    %85 = vmatprep.subr.mxu0 0.0
    %86 = vmatpush1.msra.mxu0 0.0
    %87 = vmatprep.subr.mxu0 0.0
    %88 = vmatpush1.msra.mxu0 0.0
    %89 = vmatprep.subr.mxu0 0.0
    %90 = vmatpush1.msra.mxu0 0.0
    %91 = vmatprep.subr.mxu0 0.0
    %92 = vmatpush1.msra.mxu0 0.0
    %93 = vmatprep.subr.mxu0 0.0
    %94 = vmatpush1.msra.mxu0 0.0
    %95 = vmatprep.subr.mxu0 0.0
    %96 = vmatpush1.msra.mxu0 0.0
    %97 = vmatprep.subr.mxu0 0.0
    %98 = vmatpush1.msra.mxu0 0.0
    %99 = vmatprep.subr.mxu0 0.0
    %100 = vmatpush1.msra.mxu0 0.0
    %101 = vmatprep.subr.mxu0 0.0
    %102 = vmatpush1.msra.mxu0 0.0
    %103 = vmatprep.subr.mxu0 0.0
    %104 = vmatpush1.msra.mxu0 0.0
    %105 = vmatprep.subr.mxu0 0.0
    %106 = vmatpush1.msra.mxu0 0.0
    %107 = vmatprep.subr.mxu0 0.0
    %108 = vmatpush1.msra.mxu0 0.0
    %109 = vmatprep.subr.mxu0 0.0
    %110 = vmatpush1.msra.mxu0 0.0
    %111 = vmatprep.subr.mxu0 0.0
    %112 = vmatpush1.msra.mxu0 0.0
    %113 = vmatprep.subr.mxu0 0.0
    %114 = vmatpush1.msra.mxu0 0.0
    %115 = vmatprep.subr.mxu0 0.0
    %116 = vmatpush1.msra.mxu0 0.0
    %117 = vmatprep.subr.mxu0 0.0
    %118 = vmatpush1.msra.mxu0 0.0
    %119 = vmatprep.subr.mxu0 0.0
    %120 = vmatpush1.msra.mxu0 0.0
    %121 = vmatprep.subr.mxu0 0.0
    %122 = vmatpush1.msra.mxu0 0.0
    %123 = vmatprep.mubr.f32.mxu0 0.0
    %124 = vmatmul.mubr.f32.gmra.mrb[0].mxu0 %v48
    %v125 = vpop.f32.mrb[0].mxu0
    %v126 = vadd.f32 0.0, %v125
    %v127 = vpop.f32.mrb[0].mxu0
    %v128 = vadd.f32 0.0, %v127
    %129 = vdwg.mxu0
    %130 = vmatprep.subr.mxu0 %v57
    %131 = vmatpush1.msra.mxu0 %v55
    %132 = vmatprep.subr.mxu0 0.0
    %133 = vmatpush1.msra.mxu0 0.0
    %134 = vmatprep.subr.mxu0 0.0
    %135 = vmatpush1.msra.mxu0 0.0
    %136 = vmatprep.subr.mxu0 0.0
    %137 = vmatpush1.msra.mxu0 0.0
    %138 = vmatprep.subr.mxu0 0.0
    %139 = vmatpush1.msra.mxu0 0.0
    %140 = vmatprep.subr.mxu0 0.0
    %141 = vmatpush1.msra.mxu0 0.0
    %142 = vmatprep.subr.mxu0 0.0
    %143 = vmatpush1.msra.mxu0 0.0
    %144 = vmatprep.subr.mxu0 0.0
    %145 = vmatpush1.msra.mxu0 0.0
    %146 = vmatprep.subr.mxu0 0.0
    %147 = vmatpush1.msra.mxu0 0.0
    %148 = vmatprep.subr.mxu0 0.0
    %149 = vmatpush1.msra.mxu0 0.0
    %150 = vmatprep.subr.mxu0 0.0
    %151 = vmatpush1.msra.mxu0 0.0
    %152 = vmatprep.subr.mxu0 0.0
    %153 = vmatpush1.msra.mxu0 0.0
    %154 = vmatprep.subr.mxu0 0.0
    %155 = vmatpush1.msra.mxu0 0.0
    %156 = vmatprep.subr.mxu0 0.0
    %157 = vmatpush1.msra.mxu0 0.0
    %158 = vmatprep.subr.mxu0 0.0
    %159 = vmatpush1.msra.mxu0 0.0
    %160 = vmatprep.subr.mxu0 0.0
    %161 = vmatpush1.msra.mxu0 0.0
    %162 = vmatprep.subr.mxu0 0.0
    %163 = vmatpush1.msra.mxu0 0.0
    %164 = vmatprep.subr.mxu0 0.0
    %165 = vmatpush1.msra.mxu0 0.0
    %166 = vmatprep.subr.mxu0 0.0
    %167 = vmatpush1.msra.mxu0 0.0
    %168 = vmatprep.subr.mxu0 0.0
    %169 = vmatpush1.msra.mxu0 0.0
    %170 = vmatprep.subr.mxu0 0.0
    %171 = vmatpush1.msra.mxu0 0.0
    %172 = vmatprep.subr.mxu0 0.0
    %173 = vmatpush1.msra.mxu0 0.0
    %174 = vmatprep.subr.mxu0 0.0
    %175 = vmatpush1.msra.mxu0 0.0
    %176 = vmatprep.subr.mxu0 0.0
    %177 = vmatpush1.msra.mxu0 0.0
    %178 = vmatprep.subr.mxu0 0.0
    %179 = vmatpush1.msra.mxu0 0.0
    %180 = vmatprep.subr.mxu0 0.0
    %181 = vmatpush1.msra.mxu0 0.0
    %182 = vmatprep.subr.mxu0 0.0
    %183 = vmatpush1.msra.mxu0 0.0
    %184 = vmatprep.subr.mxu0 0.0
    %185 = vmatpush1.msra.mxu0 0.0
    %186 = vmatprep.subr.mxu0 0.0
    %187 = vmatpush1.msra.mxu0 0.0
    %188 = vmatprep.subr.mxu0 0.0
    %189 = vmatpush1.msra.mxu0 0.0
    %190 = vmatprep.subr.mxu0 0.0
    %191 = vmatpush1.msra.mxu0 0.0
    %192 = vmatprep.subr.mxu0 0.0
    %193 = vmatpush1.msra.mxu0 0.0
    %194 = vmatprep.mubr.f32.mxu0 0.0
    %195 = vmatmul.mubr.f32.gmra.mrb[0].mxu0 %v48
    %v196 = vpop.f32.mrb[0].mxu0
    %v197 = vadd.f32 0.0, %v196
    %v198 = vpop.f32.mrb[0].mxu0
    %v199 = vadd.f32 0.0, %v198
    %200 = vdwg.mxu0
    %v202 = vsel %vm46, %v29, 0
    %v204 = vsel %vm50, %v24, 0
    %v206 = vsel %vm50, %v26, 0
    %v208 = vsel %vm50, %v27, 0
    %v210 = vsel %vm50, %v28, 0
    %212 = vmatprep.subr.mxu0 %v206
    %213 = vmatpush1.msra.mxu0 %v204
    %214 = vmatprep.subr.mxu0 0.0
    %215 = vmatpush1.msra.mxu0 0.0
    %216 = vmatprep.subr.mxu0 0.0
    %217 = vmatpush1.msra.mxu0 0.0
    %218 = vmatprep.subr.mxu0 0.0
    %219 = vmatpush1.msra.mxu0 0.0
    %220 = vmatprep.subr.mxu0 0.0
    %221 = vmatpush1.msra.mxu0 0.0
    %222 = vmatprep.subr.mxu0 0.0
    %223 = vmatpush1.msra.mxu0 0.0
    %224 = vmatprep.subr.mxu0 0.0
    %225 = vmatpush1.msra.mxu0 0.0
    %226 = vmatprep.subr.mxu0 0.0
    %227 = vmatpush1.msra.mxu0 0.0
    %228 = vmatprep.subr.mxu0 0.0
    %229 = vmatpush1.msra.mxu0 0.0
    %230 = vmatprep.subr.mxu0 0.0
    %231 = vmatpush1.msra.mxu0 0.0
    %232 = vmatprep.subr.mxu0 0.0
    %233 = vmatpush1.msra.mxu0 0.0
    %234 = vmatprep.subr.mxu0 0.0
    %235 = vmatpush1.msra.mxu0 0.0
    %236 = vmatprep.subr.mxu0 0.0
    %237 = vmatpush1.msra.mxu0 0.0
    %238 = vmatprep.subr.mxu0 0.0
    %239 = vmatpush1.msra.mxu0 0.0
    %240 = vmatprep.subr.mxu0 0.0
    %241 = vmatpush1.msra.mxu0 0.0
    %242 = vmatprep.subr.mxu0 0.0
    %243 = vmatpush1.msra.mxu0 0.0
    %244 = vmatprep.subr.mxu0 0.0
    %245 = vmatpush1.msra.mxu0 0.0
    %246 = vmatprep.subr.mxu0 0.0
    %247 = vmatpush1.msra.mxu0 0.0
    %248 = vmatprep.subr.mxu0 0.0
    %249 = vmatpush1.msra.mxu0 0.0
    %250 = vmatprep.subr.mxu0 0.0
    %251 = vmatpush1.msra.mxu0 0.0
    %252 = vmatprep.subr.mxu0 0.0
    %253 = vmatpush1.msra.mxu0 0.0
    %254 = vmatprep.subr.mxu0 0.0
    %255 = vmatpush1.msra.mxu0 0.0
    %256 = vmatprep.subr.mxu0 0.0
    %257 = vmatpush1.msra.mxu0 0.0
    %258 = vmatprep.subr.mxu0 0.0
    %259 = vmatpush1.msra.mxu0 0.0
    %260 = vmatprep.subr.mxu0 0.0
    %261 = vmatpush1.msra.mxu0 0.0
    %262 = vmatprep.subr.mxu0 0.0
    %263 = vmatpush1.msra.mxu0 0.0
    %264 = vmatprep.subr.mxu0 0.0
    %265 = vmatpush1.msra.mxu0 0.0
    %266 = vmatprep.subr.mxu0 0.0
    %267 = vmatpush1.msra.mxu0 0.0
    %268 = vmatprep.subr.mxu0 0.0
    %269 = vmatpush1.msra.mxu0 0.0
    %270 = vmatprep.subr.mxu0 0.0
    %271 = vmatpush1.msra.mxu0 0.0
    %272 = vmatprep.subr.mxu0 0.0
    %273 = vmatpush1.msra.mxu0 0.0
    %274 = vmatprep.subr.mxu0 0.0
    %275 = vmatpush1.msra.mxu0 0.0
    %276 = vmatprep.mubr.f32.mxu0 0.0
    %277 = vmatmul.mubr.f32.gmra.mrb[0].mxu0 %v202
    %v278 = vpop.f32.mrb[0].mxu0
    %v279 = vadd.f32 %v126, %v278
    %v280 = vpop.f32.mrb[0].mxu0
    %v281 = vadd.f32 %v128, %v280
    %282 = vdwg.mxu0
    %283 = vmatprep.subr.mxu0 %v210
    %284 = vmatpush1.msra.mxu0 %v208
    %285 = vmatprep.subr.mxu0 0.0
    %286 = vmatpush1.msra.mxu0 0.0
    %287 = vmatprep.subr.mxu0 0.0
    %288 = vmatpush1.msra.mxu0 0.0
    %289 = vmatprep.subr.mxu0 0.0
    %290 = vmatpush1.msra.mxu0 0.0
    %291 = vmatprep.subr.mxu0 0.0
    %292 = vmatpush1.msra.mxu0 0.0
    %293 = vmatprep.subr.mxu0 0.0
    %294 = vmatpush1.msra.mxu0 0.0
    %295 = vmatprep.subr.mxu0 0.0
    %296 = vmatpush1.msra.mxu0 0.0
    %297 = vmatprep.subr.mxu0 0.0
    %298 = vmatpush1.msra.mxu0 0.0
    %299 = vmatprep.subr.mxu0 0.0
    %300 = vmatpush1.msra.mxu0 0.0
    %301 = vmatprep.subr.mxu0 0.0
    %302 = vmatpush1.msra.mxu0 0.0
    %303 = vmatprep.subr.mxu0 0.0
    %304 = vmatpush1.msra.mxu0 0.0
    %305 = vmatprep.subr.mxu0 0.0
    %306 = vmatpush1.msra.mxu0 0.0
    %307 = vmatprep.subr.mxu0 0.0
    %308 = vmatpush1.msra.mxu0 0.0
    %309 = vmatprep.subr.mxu0 0.0
    %310 = vmatpush1.msra.mxu0 0.0
    %311 = vmatprep.subr.mxu0 0.0
    %312 = vmatpush1.msra.mxu0 0.0
    %313 = vmatprep.subr.mxu0 0.0
    %314 = vmatpush1.msra.mxu0 0.0
    %315 = vmatprep.subr.mxu0 0.0
    %316 = vmatpush1.msra.mxu0 0.0
    %317 = vmatprep.subr.mxu0 0.0
    %318 = vmatpush1.msra.mxu0 0.0
    %319 = vmatprep.subr.mxu0 0.0
    %320 = vmatpush1.msra.mxu0 0.0
    %321 = vmatprep.subr.mxu0 0.0
    %322 = vmatpush1.msra.mxu0 0.0
    %323 = vmatprep.subr.mxu0 0.0
    %324 = vmatpush1.msra.mxu0 0.0
    %325 = vmatprep.subr.mxu0 0.0
    %326 = vmatpush1.msra.mxu0 0.0
    %327 = vmatprep.subr.mxu0 0.0
    %328 = vmatpush1.msra.mxu0 0.0
    %329 = vmatprep.subr.mxu0 0.0
    %330 = vmatpush1.msra.mxu0 0.0
    %331 = vmatprep.subr.mxu0 0.0
    %332 = vmatpush1.msra.mxu0 0.0
    %333 = vmatprep.subr.mxu0 0.0
    %334 = vmatpush1.msra.mxu0 0.0
    %335 = vmatprep.subr.mxu0 0.0
    %336 = vmatpush1.msra.mxu0 0.0
    %337 = vmatprep.subr.mxu0 0.0
    %338 = vmatpush1.msra.mxu0 0.0
    %339 = vmatprep.subr.mxu0 0.0
    %340 = vmatpush1.msra.mxu0 0.0
    %341 = vmatprep.subr.mxu0 0.0
    %342 = vmatpush1.msra.mxu0 0.0
    %343 = vmatprep.subr.mxu0 0.0
    %344 = vmatpush1.msra.mxu0 0.0
    %345 = vmatprep.subr.mxu0 0.0
    %346 = vmatpush1.msra.mxu0 0.0
    %347 = vmatprep.mubr.f32.mxu0 0.0
    %348 = vmatmul.mubr.f32.gmra.mrb[0].mxu0 %v202
    %v349 = vpop.f32.mrb[0].mxu0
    %v350 = vadd.f32 %v197, %v349
    %v351 = vpop.f32.mrb[0].mxu0
    %v352 = vadd.f32 %v199, %v351
    %353 = vdwg.mxu0
    %354 = vrot.lane.b32.xlu0 %v24, 126
    %v355 = vpop.permute.xlu0 %354
    %356 = vrot.lane.b32.xlu0 %v26, 126
    %v357 = vpop.permute.xlu0 %356
    %vm358 = vcmp.lt.s32.totalorder %v36, 126
    %v359 = vsel %vm358, %v355, %v357
    %v360 = vsel %vm358, %v357, %v355
    %v363 = vrot.slane %v359, 2
    %v364 = vrot.slane %v360, 2
    %s365 = scalar_lea.vmem %s1, 16
    %v366 = vld [vmem:[%s365] sm:$0xff]
    %v368 = vsel %vm46, %v366, 0
    %v370 = vsel %vm50, %v359, 0
    %v372 = vsel %vm50, %v360, 0
    %v374 = vsel %vm50, %v363, 0
    %v376 = vsel %vm50, %v364, 0
    %378 = vmatprep.subr.mxu0 %v372
    %379 = vmatpush1.msra.mxu0 %v370
    %380 = vmatprep.subr.mxu0 0.0
    %381 = vmatpush1.msra.mxu0 0.0
    %382 = vmatprep.subr.mxu0 0.0
    %383 = vmatpush1.msra.mxu0 0.0
    %384 = vmatprep.subr.mxu0 0.0
    %385 = vmatpush1.msra.mxu0 0.0
    %386 = vmatprep.subr.mxu0 0.0
    %387 = vmatpush1.msra.mxu0 0.0
    %388 = vmatprep.subr.mxu0 0.0
    %389 = vmatpush1.msra.mxu0 0.0
    %390 = vmatprep.subr.mxu0 0.0
    %391 = vmatpush1.msra.mxu0 0.0
    %392 = vmatprep.subr.mxu0 0.0
    %393 = vmatpush1.msra.mxu0 0.0
    %394 = vmatprep.subr.mxu0 0.0
    %395 = vmatpush1.msra.mxu0 0.0
    %396 = vmatprep.subr.mxu0 0.0
    %397 = vmatpush1.msra.mxu0 0.0
    %398 = vmatprep.subr.mxu0 0.0
    %399 = vmatpush1.msra.mxu0 0.0
    %400 = vmatprep.subr.mxu0 0.0
    %401 = vmatpush1.msra.mxu0 0.0
    %402 = vmatprep.subr.mxu0 0.0
    %403 = vmatpush1.msra.mxu0 0.0
    %404 = vmatprep.subr.mxu0 0.0
    %405 = vmatpush1.msra.mxu0 0.0
    %406 = vmatprep.subr.mxu0 0.0
    %407 = vmatpush1.msra.mxu0 0.0
    %408 = vmatprep.subr.mxu0 0.0
    %409 = vmatpush1.msra.mxu0 0.0
    %410 = vmatprep.subr.mxu0 0.0
    %411 = vmatpush1.msra.mxu0 0.0
    %412 = vmatprep.subr.mxu0 0.0
    %413 = vmatpush1.msra.mxu0 0.0
    %414 = vmatprep.subr.mxu0 0.0
    %415 = vmatpush1.msra.mxu0 0.0
    %416 = vmatprep.subr.mxu0 0.0
    %417 = vmatpush1.msra.mxu0 0.0
    %418 = vmatprep.subr.mxu0 0.0
    %419 = vmatpush1.msra.mxu0 0.0
    %420 = vmatprep.subr.mxu0 0.0
    %421 = vmatpush1.msra.mxu0 0.0
    %422 = vmatprep.subr.mxu0 0.0
    %423 = vmatpush1.msra.mxu0 0.0
    %424 = vmatprep.subr.mxu0 0.0
    %425 = vmatpush1.msra.mxu0 0.0
    %426 = vmatprep.subr.mxu0 0.0
    %427 = vmatpush1.msra.mxu0 0.0
    %428 = vmatprep.subr.mxu0 0.0
    %429 = vmatpush1.msra.mxu0 0.0
    %430 = vmatprep.subr.mxu0 0.0
    %431 = vmatpush1.msra.mxu0 0.0
    %432 = vmatprep.subr.mxu0 0.0
    %433 = vmatpush1.msra.mxu0 0.0
    %434 = vmatprep.subr.mxu0 0.0
    %435 = vmatpush1.msra.mxu0 0.0
    %436 = vmatprep.subr.mxu0 0.0
    %437 = vmatpush1.msra.mxu0 0.0
    %438 = vmatprep.subr.mxu0 0.0
    %439 = vmatpush1.msra.mxu0 0.0
    %440 = vmatprep.subr.mxu0 0.0
    %441 = vmatpush1.msra.mxu0 0.0
    %442 = vmatprep.mubr.f32.mxu0 0.0
    %443 = vmatmul.mubr.f32.gmra.mrb[0].mxu0 %v368
    %v444 = vpop.f32.mrb[0].mxu0
    %v445 = vadd.f32 0.0, %v444
    %v446 = vpop.f32.mrb[0].mxu0
    %v447 = vadd.f32 0.0, %v446
    %448 = vdwg.mxu0
    %449 = vmatprep.subr.mxu0 %v376
    %450 = vmatpush1.msra.mxu0 %v374
    %451 = vmatprep.subr.mxu0 0.0
    %452 = vmatpush1.msra.mxu0 0.0
    %453 = vmatprep.subr.mxu0 0.0
    %454 = vmatpush1.msra.mxu0 0.0
    %455 = vmatprep.subr.mxu0 0.0
    %456 = vmatpush1.msra.mxu0 0.0
    %457 = vmatprep.subr.mxu0 0.0
    %458 = vmatpush1.msra.mxu0 0.0
    %459 = vmatprep.subr.mxu0 0.0
    %460 = vmatpush1.msra.mxu0 0.0
    %461 = vmatprep.subr.mxu0 0.0
    %462 = vmatpush1.msra.mxu0 0.0
    %463 = vmatprep.subr.mxu0 0.0
    %464 = vmatpush1.msra.mxu0 0.0
    %465 = vmatprep.subr.mxu0 0.0
    %466 = vmatpush1.msra.mxu0 0.0
    %467 = vmatprep.subr.mxu0 0.0
    %468 = vmatpush1.msra.mxu0 0.0
    %469 = vmatprep.subr.mxu0 0.0
    %470 = vmatpush1.msra.mxu0 0.0
    %471 = vmatprep.subr.mxu0 0.0
    %472 = vmatpush1.msra.mxu0 0.0
    %473 = vmatprep.subr.mxu0 0.0
    %474 = vmatpush1.msra.mxu0 0.0
    %475 = vmatprep.subr.mxu0 0.0
    %476 = vmatpush1.msra.mxu0 0.0
    %477 = vmatprep.subr.mxu0 0.0
    %478 = vmatpush1.msra.mxu0 0.0
    %479 = vmatprep.subr.mxu0 0.0
    %480 = vmatpush1.msra.mxu0 0.0
    %481 = vmatprep.subr.mxu0 0.0
    %482 = vmatpush1.msra.mxu0 0.0
    %483 = vmatprep.subr.mxu0 0.0
    %484 = vmatpush1.msra.mxu0 0.0
    %485 = vmatprep.subr.mxu0 0.0
    %486 = vmatpush1.msra.mxu0 0.0
    %487 = vmatprep.subr.mxu0 0.0
    %488 = vmatpush1.msra.mxu0 0.0
    %489 = vmatprep.subr.mxu0 0.0
    %490 = vmatpush1.msra.mxu0 0.0
    %491 = vmatprep.subr.mxu0 0.0
    %492 = vmatpush1.msra.mxu0 0.0
    %493 = vmatprep.subr.mxu0 0.0
    %494 = vmatpush1.msra.mxu0 0.0
    %495 = vmatprep.subr.mxu0 0.0
    %496 = vmatpush1.msra.mxu0 0.0
    %497 = vmatprep.subr.mxu0 0.0
    %498 = vmatpush1.msra.mxu0 0.0
    %499 = vmatprep.subr.mxu0 0.0
    %500 = vmatpush1.msra.mxu0 0.0
    %501 = vmatprep.subr.mxu0 0.0
    %502 = vmatpush1.msra.mxu0 0.0
    %503 = vmatprep.subr.mxu0 0.0
    %504 = vmatpush1.msra.mxu0 0.0
    %505 = vmatprep.subr.mxu0 0.0
    %506 = vmatpush1.msra.mxu0 0.0
    %507 = vmatprep.subr.mxu0 0.0
    %508 = vmatpush1.msra.mxu0 0.0
    %509 = vmatprep.subr.mxu0 0.0
    %510 = vmatpush1.msra.mxu0 0.0
    %511 = vmatprep.subr.mxu0 0.0
    %512 = vmatpush1.msra.mxu0 0.0
    %513 = vmatprep.mubr.f32.mxu0 0.0
    %514 = vmatmul.mubr.f32.gmra.mrb[0].mxu0 %v368
    %v515 = vpop.f32.mrb[0].mxu0
    %v516 = vadd.f32 0.0, %v515
    %v517 = vpop.f32.mrb[0].mxu0
    %v518 = vadd.f32 0.0, %v517
    %519 = vdwg.mxu0
    %v520 = vadd.f32 %v279, %v445
    %v521 = vadd.f32 %v281, %v447
    %v522 = vadd.f32 %v350, %v516
    %v523 = vadd.f32 %v352, %v518
    %524 = vrot.lane.b32.xlu0 %v24, 112
    %v525 = vpop.permute.xlu0 %524
    %526 = vrot.lane.b32.xlu0 %v26, 112
    %v527 = vpop.permute.xlu0 %526
    %vm528 = vcmp.lt.s32.totalorder %v36, 112
    %v529 = vsel %vm528, %v525, %v527
    %v530 = vsel %vm528, %v527, %v525
    %v533 = vrot.slane %v529, 2
    %v534 = vrot.slane %v530, 2
    %s535 = scalar_lea.vmem %s1, 24
    %v536 = vld [vmem:[%s535] sm:$0xff]
    %v538 = vsel %vm46, %v536, 0
    %v540 = vsel %vm50, %v529, 0
    %v542 = vsel %vm50, %v530, 0
    %v544 = vsel %vm50, %v533, 0
    %v546 = vsel %vm50, %v534, 0
    %548 = vmatprep.subr.mxu0 %v542
    %549 = vmatpush1.msra.mxu0 %v540
    %550 = vmatprep.subr.mxu0 0.0
    %551 = vmatpush1.msra.mxu0 0.0
    %552 = vmatprep.subr.mxu0 0.0
    %553 = vmatpush1.msra.mxu0 0.0
    %554 = vmatprep.subr.mxu0 0.0
    %555 = vmatpush1.msra.mxu0 0.0
    %556 = vmatprep.subr.mxu0 0.0
    %557 = vmatpush1.msra.mxu0 0.0
    %558 = vmatprep.subr.mxu0 0.0
    %559 = vmatpush1.msra.mxu0 0.0
    %560 = vmatprep.subr.mxu0 0.0
    %561 = vmatpush1.msra.mxu0 0.0
    %562 = vmatprep.subr.mxu0 0.0
    %563 = vmatpush1.msra.mxu0 0.0
    %564 = vmatprep.subr.mxu0 0.0
    %565 = vmatpush1.msra.mxu0 0.0
    %566 = vmatprep.subr.mxu0 0.0
    %567 = vmatpush1.msra.mxu0 0.0
    %568 = vmatprep.subr.mxu0 0.0
    %569 = vmatpush1.msra.mxu0 0.0
    %570 = vmatprep.subr.mxu0 0.0
    %571 = vmatpush1.msra.mxu0 0.0
    %572 = vmatprep.subr.mxu0 0.0
    %573 = vmatpush1.msra.mxu0 0.0
    %574 = vmatprep.subr.mxu0 0.0
    %575 = vmatpush1.msra.mxu0 0.0
    %576 = vmatprep.subr.mxu0 0.0
    %577 = vmatpush1.msra.mxu0 0.0
    %578 = vmatprep.subr.mxu0 0.0
    %579 = vmatpush1.msra.mxu0 0.0
    %580 = vmatprep.subr.mxu0 0.0
    %581 = vmatpush1.msra.mxu0 0.0
    %582 = vmatprep.subr.mxu0 0.0
    %583 = vmatpush1.msra.mxu0 0.0
    %584 = vmatprep.subr.mxu0 0.0
    %585 = vmatpush1.msra.mxu0 0.0
    %586 = vmatprep.subr.mxu0 0.0
    %587 = vmatpush1.msra.mxu0 0.0
    %588 = vmatprep.subr.mxu0 0.0
    %589 = vmatpush1.msra.mxu0 0.0
    %590 = vmatprep.subr.mxu0 0.0
    %591 = vmatpush1.msra.mxu0 0.0
    %592 = vmatprep.subr.mxu0 0.0
    %593 = vmatpush1.msra.mxu0 0.0
    %594 = vmatprep.subr.mxu0 0.0
    %595 = vmatpush1.msra.mxu0 0.0
    %596 = vmatprep.subr.mxu0 0.0
    %597 = vmatpush1.msra.mxu0 0.0
    %598 = vmatprep.subr.mxu0 0.0
    %599 = vmatpush1.msra.mxu0 0.0
    %600 = vmatprep.subr.mxu0 0.0
    %601 = vmatpush1.msra.mxu0 0.0
    %602 = vmatprep.subr.mxu0 0.0
    %603 = vmatpush1.msra.mxu0 0.0
    %604 = vmatprep.subr.mxu0 0.0
    %605 = vmatpush1.msra.mxu0 0.0
    %606 = vmatprep.subr.mxu0 0.0
    %607 = vmatpush1.msra.mxu0 0.0
    %608 = vmatprep.subr.mxu0 0.0
    %609 = vmatpush1.msra.mxu0 0.0
    %610 = vmatprep.subr.mxu0 0.0
    %611 = vmatpush1.msra.mxu0 0.0
    %612 = vmatprep.mubr.f32.mxu0 0.0
    %613 = vmatmul.mubr.f32.gmra.mrb[0].mxu0 %v538
    %v614 = vpop.f32.mrb[0].mxu0
    %v615 = vadd.f32 0.0, %v614
    %v616 = vpop.f32.mrb[0].mxu0
    %v617 = vadd.f32 0.0, %v616
    %618 = vdwg.mxu0
    %619 = vmatprep.subr.mxu0 %v546
    %620 = vmatpush1.msra.mxu0 %v544
    %621 = vmatprep.subr.mxu0 0.0
    %622 = vmatpush1.msra.mxu0 0.0
    %623 = vmatprep.subr.mxu0 0.0
    %624 = vmatpush1.msra.mxu0 0.0
    %625 = vmatprep.subr.mxu0 0.0
    %626 = vmatpush1.msra.mxu0 0.0
    %627 = vmatprep.subr.mxu0 0.0
    %628 = vmatpush1.msra.mxu0 0.0
    %629 = vmatprep.subr.mxu0 0.0
    %630 = vmatpush1.msra.mxu0 0.0
    %631 = vmatprep.subr.mxu0 0.0
    %632 = vmatpush1.msra.mxu0 0.0
    %633 = vmatprep.subr.mxu0 0.0
    %634 = vmatpush1.msra.mxu0 0.0
    %635 = vmatprep.subr.mxu0 0.0
    %636 = vmatpush1.msra.mxu0 0.0
    %637 = vmatprep.subr.mxu0 0.0
    %638 = vmatpush1.msra.mxu0 0.0
    %639 = vmatprep.subr.mxu0 0.0
    %640 = vmatpush1.msra.mxu0 0.0
    %641 = vmatprep.subr.mxu0 0.0
    %642 = vmatpush1.msra.mxu0 0.0
    %643 = vmatprep.subr.mxu0 0.0
    %644 = vmatpush1.msra.mxu0 0.0
    %645 = vmatprep.subr.mxu0 0.0
    %646 = vmatpush1.msra.mxu0 0.0
    %647 = vmatprep.subr.mxu0 0.0
    %648 = vmatpush1.msra.mxu0 0.0
    %649 = vmatprep.subr.mxu0 0.0
    %650 = vmatpush1.msra.mxu0 0.0
    %651 = vmatprep.subr.mxu0 0.0
    %652 = vmatpush1.msra.mxu0 0.0
    %653 = vmatprep.subr.mxu0 0.0
    %654 = vmatpush1.msra.mxu0 0.0
    %655 = vmatprep.subr.mxu0 0.0
    %656 = vmatpush1.msra.mxu0 0.0
    %657 = vmatprep.subr.mxu0 0.0
    %658 = vmatpush1.msra.mxu0 0.0
    %659 = vmatprep.subr.mxu0 0.0
    %660 = vmatpush1.msra.mxu0 0.0
    %661 = vmatprep.subr.mxu0 0.0
    %662 = vmatpush1.msra.mxu0 0.0
    %663 = vmatprep.subr.mxu0 0.0
    %664 = vmatpush1.msra.mxu0 0.0
    %665 = vmatprep.subr.mxu0 0.0
    %666 = vmatpush1.msra.mxu0 0.0
    %667 = vmatprep.subr.mxu0 0.0
    %668 = vmatpush1.msra.mxu0 0.0
    %669 = vmatprep.subr.mxu0 0.0
    %670 = vmatpush1.msra.mxu0 0.0
    %671 = vmatprep.subr.mxu0 0.0
    %672 = vmatpush1.msra.mxu0 0.0
    %673 = vmatprep.subr.mxu0 0.0
    %674 = vmatpush1.msra.mxu0 0.0
    %675 = vmatprep.subr.mxu0 0.0
    %676 = vmatpush1.msra.mxu0 0.0
    %677 = vmatprep.subr.mxu0 0.0
    %678 = vmatpush1.msra.mxu0 0.0
    %679 = vmatprep.subr.mxu0 0.0
    %680 = vmatpush1.msra.mxu0 0.0
    %681 = vmatprep.subr.mxu0 0.0
    %682 = vmatpush1.msra.mxu0 0.0
    %683 = vmatprep.mubr.f32.mxu0 0.0
    %684 = vmatmul.mubr.f32.gmra.mrb[0].mxu0 %v538
    %v685 = vpop.f32.mrb[0].mxu0
    %v686 = vadd.f32 0.0, %v685
    %v687 = vpop.f32.mrb[0].mxu0
    %v688 = vadd.f32 0.0, %v687
    %689 = vdwg.mxu0
    %v690 = vadd.f32 %v520, %v615
    %v691 = vadd.f32 %v521, %v617
    %v692 = vadd.f32 %v522, %v686
    %v693 = vadd.f32 %v523, %v688
    %694 = vrot.lane.b32.xlu0 %v24, 111
    %v695 = vpop.permute.xlu0 %694
    %696 = vrot.lane.b32.xlu0 %v26, 111
    %v697 = vpop.permute.xlu0 %696
    %vm698 = vcmp.lt.s32.totalorder %v36, 111
    %v699 = vsel %vm698, %v695, %v697
    %v700 = vsel %vm698, %v697, %v695
    %v703 = vrot.slane %v699, 2
    %v704 = vrot.slane %v700, 2
    %s705 = scalar_lea.vmem %s1, 32
    %v706 = vld [vmem:[%s705] sm:$0xff]
    %v708 = vsel %vm46, %v706, 0
    %v710 = vsel %vm50, %v699, 0
    %v712 = vsel %vm50, %v700, 0
    %v714 = vsel %vm50, %v703, 0
    %v716 = vsel %vm50, %v704, 0
    %718 = vmatprep.subr.mxu0 %v712
    %719 = vmatpush1.msra.mxu0 %v710
    %720 = vmatprep.subr.mxu0 0.0
    %721 = vmatpush1.msra.mxu0 0.0
    %722 = vmatprep.subr.mxu0 0.0
    %723 = vmatpush1.msra.mxu0 0.0
    %724 = vmatprep.subr.mxu0 0.0
    %725 = vmatpush1.msra.mxu0 0.0
    %726 = vmatprep.subr.mxu0 0.0
    %727 = vmatpush1.msra.mxu0 0.0
    %728 = vmatprep.subr.mxu0 0.0
    %729 = vmatpush1.msra.mxu0 0.0
    %730 = vmatprep.subr.mxu0 0.0
    %731 = vmatpush1.msra.mxu0 0.0
    %732 = vmatprep.subr.mxu0 0.0
    %733 = vmatpush1.msra.mxu0 0.0
    %734 = vmatprep.subr.mxu0 0.0
    %735 = vmatpush1.msra.mxu0 0.0
    %736 = vmatprep.subr.mxu0 0.0
    %737 = vmatpush1.msra.mxu0 0.0
    %738 = vmatprep.subr.mxu0 0.0
    %739 = vmatpush1.msra.mxu0 0.0
    %740 = vmatprep.subr.mxu0 0.0
    %741 = vmatpush1.msra.mxu0 0.0
    %742 = vmatprep.subr.mxu0 0.0
    %743 = vmatpush1.msra.mxu0 0.0
    %744 = vmatprep.subr.mxu0 0.0
    %745 = vmatpush1.msra.mxu0 0.0
    %746 = vmatprep.subr.mxu0 0.0
    %747 = vmatpush1.msra.mxu0 0.0
    %748 = vmatprep.subr.mxu0 0.0
    %749 = vmatpush1.msra.mxu0 0.0
    %750 = vmatprep.subr.mxu0 0.0
    %751 = vmatpush1.msra.mxu0 0.0
    %752 = vmatprep.subr.mxu0 0.0
    %753 = vmatpush1.msra.mxu0 0.0
    %754 = vmatprep.subr.mxu0 0.0
    %755 = vmatpush1.msra.mxu0 0.0
    %756 = vmatprep.subr.mxu0 0.0
    %757 = vmatpush1.msra.mxu0 0.0
    %758 = vmatprep.subr.mxu0 0.0
    %759 = vmatpush1.msra.mxu0 0.0
    %760 = vmatprep.subr.mxu0 0.0
    %761 = vmatpush1.msra.mxu0 0.0
    %762 = vmatprep.subr.mxu0 0.0
    %763 = vmatpush1.msra.mxu0 0.0
    %764 = vmatprep.subr.mxu0 0.0
    %765 = vmatpush1.msra.mxu0 0.0
    %766 = vmatprep.subr.mxu0 0.0
    %767 = vmatpush1.msra.mxu0 0.0
    %768 = vmatprep.subr.mxu0 0.0
    %769 = vmatpush1.msra.mxu0 0.0
    %770 = vmatprep.subr.mxu0 0.0
    %771 = vmatpush1.msra.mxu0 0.0
    %772 = vmatprep.subr.mxu0 0.0
    %773 = vmatpush1.msra.mxu0 0.0
    %774 = vmatprep.subr.mxu0 0.0
    %775 = vmatpush1.msra.mxu0 0.0
    %776 = vmatprep.subr.mxu0 0.0
    %777 = vmatpush1.msra.mxu0 0.0
    %778 = vmatprep.subr.mxu0 0.0
    %779 = vmatpush1.msra.mxu0 0.0
    %780 = vmatprep.subr.mxu0 0.0
    %781 = vmatpush1.msra.mxu0 0.0
    %782 = vmatprep.mubr.f32.mxu0 0.0
    %783 = vmatmul.mubr.f32.gmra.mrb[0].mxu0 %v708
    %v784 = vpop.f32.mrb[0].mxu0
    %v785 = vadd.f32 0.0, %v784
    %v786 = vpop.f32.mrb[0].mxu0
    %v787 = vadd.f32 0.0, %v786
    %788 = vdwg.mxu0
    %789 = vmatprep.subr.mxu0 %v716
    %790 = vmatpush1.msra.mxu0 %v714
    %791 = vmatprep.subr.mxu0 0.0
    %792 = vmatpush1.msra.mxu0 0.0
    %793 = vmatprep.subr.mxu0 0.0
    %794 = vmatpush1.msra.mxu0 0.0
    %795 = vmatprep.subr.mxu0 0.0
    %796 = vmatpush1.msra.mxu0 0.0
    %797 = vmatprep.subr.mxu0 0.0
    %798 = vmatpush1.msra.mxu0 0.0
    %799 = vmatprep.subr.mxu0 0.0
    %800 = vmatpush1.msra.mxu0 0.0
    %801 = vmatprep.subr.mxu0 0.0
    %802 = vmatpush1.msra.mxu0 0.0
    %803 = vmatprep.subr.mxu0 0.0
    %804 = vmatpush1.msra.mxu0 0.0
    %805 = vmatprep.subr.mxu0 0.0
    %806 = vmatpush1.msra.mxu0 0.0
    %807 = vmatprep.subr.mxu0 0.0
    %808 = vmatpush1.msra.mxu0 0.0
    %809 = vmatprep.subr.mxu0 0.0
    %810 = vmatpush1.msra.mxu0 0.0
    %811 = vmatprep.subr.mxu0 0.0
    %812 = vmatpush1.msra.mxu0 0.0
    %813 = vmatprep.subr.mxu0 0.0
    %814 = vmatpush1.msra.mxu0 0.0
    %815 = vmatprep.subr.mxu0 0.0
    %816 = vmatpush1.msra.mxu0 0.0
    %817 = vmatprep.subr.mxu0 0.0
    %818 = vmatpush1.msra.mxu0 0.0
    %819 = vmatprep.subr.mxu0 0.0
    %820 = vmatpush1.msra.mxu0 0.0
    %821 = vmatprep.subr.mxu0 0.0
    %822 = vmatpush1.msra.mxu0 0.0
    %823 = vmatprep.subr.mxu0 0.0
    %824 = vmatpush1.msra.mxu0 0.0
    %825 = vmatprep.subr.mxu0 0.0
    %826 = vmatpush1.msra.mxu0 0.0
    %827 = vmatprep.subr.mxu0 0.0
    %828 = vmatpush1.msra.mxu0 0.0
    %829 = vmatprep.subr.mxu0 0.0
    %830 = vmatpush1.msra.mxu0 0.0
    %831 = vmatprep.subr.mxu0 0.0
    %832 = vmatpush1.msra.mxu0 0.0
    %833 = vmatprep.subr.mxu0 0.0
    %834 = vmatpush1.msra.mxu0 0.0
    %835 = vmatprep.subr.mxu0 0.0
    %836 = vmatpush1.msra.mxu0 0.0
    %837 = vmatprep.subr.mxu0 0.0
    %838 = vmatpush1.msra.mxu0 0.0
    %839 = vmatprep.subr.mxu0 0.0
    %840 = vmatpush1.msra.mxu0 0.0
    %841 = vmatprep.subr.mxu0 0.0
    %842 = vmatpush1.msra.mxu0 0.0
    %843 = vmatprep.subr.mxu0 0.0
    %844 = vmatpush1.msra.mxu0 0.0
    %845 = vmatprep.subr.mxu0 0.0
    %846 = vmatpush1.msra.mxu0 0.0
    %847 = vmatprep.subr.mxu0 0.0
    %848 = vmatpush1.msra.mxu0 0.0
    %849 = vmatprep.subr.mxu0 0.0
    %850 = vmatpush1.msra.mxu0 0.0
    %851 = vmatprep.subr.mxu0 0.0
    %852 = vmatpush1.msra.mxu0 0.0
    %853 = vmatprep.mubr.f32.mxu0 0.0
    %854 = vmatmul.mubr.f32.gmra.mrb[0].mxu0 %v708
    %v855 = vpop.f32.mrb[0].mxu0
    %v856 = vadd.f32 0.0, %v855
    %v857 = vpop.f32.mrb[0].mxu0
    %v858 = vadd.f32 0.0, %v857
    %859 = vdwg.mxu0
    %v860 = vadd.f32 %v690, %v785
    %v861 = vadd.f32 %v691, %v787
    %v862 = vadd.f32 %v692, %v856
    %v863 = vadd.f32 %v693, %v858
    %864 = vrot.lane.b32.xlu0 %v24, 110
    %v865 = vpop.permute.xlu0 %864
    %866 = vrot.lane.b32.xlu0 %v26, 110
    %v867 = vpop.permute.xlu0 %866
    %vm868 = vcmp.lt.s32.totalorder %v36, 110
    %v869 = vsel %vm868, %v865, %v867
    %v870 = vsel %vm868, %v867, %v865
    %v873 = vrot.slane %v869, 2
    %v874 = vrot.slane %v870, 2
    %s875 = scalar_lea.vmem %s1, 40
    %v876 = vld [vmem:[%s875] sm:$0xff]
    %v878 = vsel %vm46, %v876, 0
    %v880 = vsel %vm50, %v869, 0
    %v882 = vsel %vm50, %v870, 0
    %v884 = vsel %vm50, %v873, 0
    %v886 = vsel %vm50, %v874, 0
    %888 = vmatprep.subr.mxu0 %v882
    %889 = vmatpush1.msra.mxu0 %v880
    %890 = vmatprep.subr.mxu0 0.0
    %891 = vmatpush1.msra.mxu0 0.0
    %892 = vmatprep.subr.mxu0 0.0
    %893 = vmatpush1.msra.mxu0 0.0
    %894 = vmatprep.subr.mxu0 0.0
    %895 = vmatpush1.msra.mxu0 0.0
    %896 = vmatprep.subr.mxu0 0.0
    %897 = vmatpush1.msra.mxu0 0.0
    %898 = vmatprep.subr.mxu0 0.0
    %899 = vmatpush1.msra.mxu0 0.0
    %900 = vmatprep.subr.mxu0 0.0
    %901 = vmatpush1.msra.mxu0 0.0
    %902 = vmatprep.subr.mxu0 0.0
    %903 = vmatpush1.msra.mxu0 0.0
    %904 = vmatprep.subr.mxu0 0.0
    %905 = vmatpush1.msra.mxu0 0.0
    %906 = vmatprep.subr.mxu0 0.0
    %907 = vmatpush1.msra.mxu0 0.0
    %908 = vmatprep.subr.mxu0 0.0
    %909 = vmatpush1.msra.mxu0 0.0
    %910 = vmatprep.subr.mxu0 0.0
    %911 = vmatpush1.msra.mxu0 0.0
    %912 = vmatprep.subr.mxu0 0.0
    %913 = vmatpush1.msra.mxu0 0.0
    %914 = vmatprep.subr.mxu0 0.0
    %915 = vmatpush1.msra.mxu0 0.0
    %916 = vmatprep.subr.mxu0 0.0
    %917 = vmatpush1.msra.mxu0 0.0
    %918 = vmatprep.subr.mxu0 0.0
    %919 = vmatpush1.msra.mxu0 0.0
    %920 = vmatprep.subr.mxu0 0.0
    %921 = vmatpush1.msra.mxu0 0.0
    %922 = vmatprep.subr.mxu0 0.0
    %923 = vmatpush1.msra.mxu0 0.0
    %924 = vmatprep.subr.mxu0 0.0
    %925 = vmatpush1.msra.mxu0 0.0
    %926 = vmatprep.subr.mxu0 0.0
    %927 = vmatpush1.msra.mxu0 0.0
    %928 = vmatprep.subr.mxu0 0.0
    %929 = vmatpush1.msra.mxu0 0.0
    %930 = vmatprep.subr.mxu0 0.0
    %931 = vmatpush1.msra.mxu0 0.0
    %932 = vmatprep.subr.mxu0 0.0
    %933 = vmatpush1.msra.mxu0 0.0
    %934 = vmatprep.subr.mxu0 0.0
    %935 = vmatpush1.msra.mxu0 0.0
    %936 = vmatprep.subr.mxu0 0.0
    %937 = vmatpush1.msra.mxu0 0.0
    %938 = vmatprep.subr.mxu0 0.0
    %939 = vmatpush1.msra.mxu0 0.0
    %940 = vmatprep.subr.mxu0 0.0
    %941 = vmatpush1.msra.mxu0 0.0
    %942 = vmatprep.subr.mxu0 0.0
    %943 = vmatpush1.msra.mxu0 0.0
    %944 = vmatprep.subr.mxu0 0.0
    %945 = vmatpush1.msra.mxu0 0.0
    %946 = vmatprep.subr.mxu0 0.0
    %947 = vmatpush1.msra.mxu0 0.0
    %948 = vmatprep.subr.mxu0 0.0
    %949 = vmatpush1.msra.mxu0 0.0
    %950 = vmatprep.subr.mxu0 0.0
    %951 = vmatpush1.msra.mxu0 0.0
    %952 = vmatprep.mubr.f32.mxu0 0.0
    %953 = vmatmul.mubr.f32.gmra.mrb[0].mxu0 %v878
    %v954 = vpop.f32.mrb[0].mxu0
    %v955 = vadd.f32 0.0, %v954
    %v956 = vpop.f32.mrb[0].mxu0
    %v957 = vadd.f32 0.0, %v956
    %958 = vdwg.mxu0
    %959 = vmatprep.subr.mxu0 %v886
    %960 = vmatpush1.msra.mxu0 %v884
    %961 = vmatprep.subr.mxu0 0.0
    %962 = vmatpush1.msra.mxu0 0.0
    %963 = vmatprep.subr.mxu0 0.0
    %964 = vmatpush1.msra.mxu0 0.0
    %965 = vmatprep.subr.mxu0 0.0
    %966 = vmatpush1.msra.mxu0 0.0
    %967 = vmatprep.subr.mxu0 0.0
    %968 = vmatpush1.msra.mxu0 0.0
    %969 = vmatprep.subr.mxu0 0.0
    %970 = vmatpush1.msra.mxu0 0.0
    %971 = vmatprep.subr.mxu0 0.0
    %972 = vmatpush1.msra.mxu0 0.0
    %973 = vmatprep.subr.mxu0 0.0
    %974 = vmatpush1.msra.mxu0 0.0
    %975 = vmatprep.subr.mxu0 0.0
    %976 = vmatpush1.msra.mxu0 0.0
    %977 = vmatprep.subr.mxu0 0.0
    %978 = vmatpush1.msra.mxu0 0.0
    %979 = vmatprep.subr.mxu0 0.0
    %980 = vmatpush1.msra.mxu0 0.0
    %981 = vmatprep.subr.mxu0 0.0
    %982 = vmatpush1.msra.mxu0 0.0
    %983 = vmatprep.subr.mxu0 0.0
    %984 = vmatpush1.msra.mxu0 0.0
    %985 = vmatprep.subr.mxu0 0.0
    %986 = vmatpush1.msra.mxu0 0.0
    %987 = vmatprep.subr.mxu0 0.0
    %988 = vmatpush1.msra.mxu0 0.0
    %989 = vmatprep.subr.mxu0 0.0
    %990 = vmatpush1.msra.mxu0 0.0
    %991 = vmatprep.subr.mxu0 0.0
    %992 = vmatpush1.msra.mxu0 0.0
    %993 = vmatprep.subr.mxu0 0.0
    %994 = vmatpush1.msra.mxu0 0.0
    %995 = vmatprep.subr.mxu0 0.0
    %996 = vmatpush1.msra.mxu0 0.0
    %997 = vmatprep.subr.mxu0 0.0
    %998 = vmatpush1.msra.mxu0 0.0
    %999 = vmatprep.subr.mxu0 0.0
    %1000 = vmatpush1.msra.mxu0 0.0
    %1001 = vmatprep.subr.mxu0 0.0
    %1002 = vmatpush1.msra.mxu0 0.0
    %1003 = vmatprep.subr.mxu0 0.0
    %1004 = vmatpush1.msra.mxu0 0.0
    %1005 = vmatprep.subr.mxu0 0.0
    %1006 = vmatpush1.msra.mxu0 0.0
    %1007 = vmatprep.subr.mxu0 0.0
    %1008 = vmatpush1.msra.mxu0 0.0
    %1009 = vmatprep.subr.mxu0 0.0
    %1010 = vmatpush1.msra.mxu0 0.0
    %1011 = vmatprep.subr.mxu0 0.0
    %1012 = vmatpush1.msra.mxu0 0.0
    %1013 = vmatprep.subr.mxu0 0.0
    %1014 = vmatpush1.msra.mxu0 0.0
    %1015 = vmatprep.subr.mxu0 0.0
    %1016 = vmatpush1.msra.mxu0 0.0
    %1017 = vmatprep.subr.mxu0 0.0
    %1018 = vmatpush1.msra.mxu0 0.0
    %1019 = vmatprep.subr.mxu0 0.0
    %1020 = vmatpush1.msra.mxu0 0.0
    %1021 = vmatprep.subr.mxu0 0.0
    %1022 = vmatpush1.msra.mxu0 0.0
    %1023 = vmatprep.mubr.f32.mxu0 0.0
    %1024 = vmatmul.mubr.f32.gmra.mrb[0].mxu0 %v878
    %v1025 = vpop.f32.mrb[0].mxu0
    %v1026 = vadd.f32 0.0, %v1025
    %v1027 = vpop.f32.mrb[0].mxu0
    %v1028 = vadd.f32 0.0, %v1027
    %1029 = vdwg.mxu0
    %v1030 = vadd.f32 %v860, %v955
    %v1031 = vadd.f32 %v861, %v957
    %v1032 = vadd.f32 %v862, %v1026
    %v1033 = vadd.f32 %v863, %v1028
    %1034 = vrot.lane.b32.xlu0 %v24, 96
    %v1035 = vpop.permute.xlu0 %1034
    %1036 = vrot.lane.b32.xlu0 %v26, 96
    %v1037 = vpop.permute.xlu0 %1036
    %vm1038 = vcmp.lt.s32.totalorder %v36, 96
    %v1039 = vsel %vm1038, %v1035, %v1037
    %v1040 = vsel %vm1038, %v1037, %v1035
    %v1043 = vrot.slane %v1039, 2
    %v1044 = vrot.slane %v1040, 2
    %s1045 = scalar_lea.vmem %s1, 48
    %v1046 = vld [vmem:[%s1045] sm:$0xff]
    %v1048 = vsel %vm46, %v1046, 0
    %v1050 = vsel %vm50, %v1039, 0
    %v1052 = vsel %vm50, %v1040, 0
    %v1054 = vsel %vm50, %v1043, 0
    %v1056 = vsel %vm50, %v1044, 0
    %1058 = vmatprep.subr.mxu0 %v1052
    %1059 = vmatpush1.msra.mxu0 %v1050
    %1060 = vmatprep.subr.mxu0 0.0
    %1061 = vmatpush1.msra.mxu0 0.0
    %1062 = vmatprep.subr.mxu0 0.0
    %1063 = vmatpush1.msra.mxu0 0.0
    %1064 = vmatprep.subr.mxu0 0.0
    %1065 = vmatpush1.msra.mxu0 0.0
    %1066 = vmatprep.subr.mxu0 0.0
    %1067 = vmatpush1.msra.mxu0 0.0
    %1068 = vmatprep.subr.mxu0 0.0
    %1069 = vmatpush1.msra.mxu0 0.0
    %1070 = vmatprep.subr.mxu0 0.0
    %1071 = vmatpush1.msra.mxu0 0.0
    %1072 = vmatprep.subr.mxu0 0.0
    %1073 = vmatpush1.msra.mxu0 0.0
    %1074 = vmatprep.subr.mxu0 0.0
    %1075 = vmatpush1.msra.mxu0 0.0
    %1076 = vmatprep.subr.mxu0 0.0
    %1077 = vmatpush1.msra.mxu0 0.0
    %1078 = vmatprep.subr.mxu0 0.0
    %1079 = vmatpush1.msra.mxu0 0.0
    %1080 = vmatprep.subr.mxu0 0.0
    %1081 = vmatpush1.msra.mxu0 0.0
    %1082 = vmatprep.subr.mxu0 0.0
    %1083 = vmatpush1.msra.mxu0 0.0
    %1084 = vmatprep.subr.mxu0 0.0
    %1085 = vmatpush1.msra.mxu0 0.0
    %1086 = vmatprep.subr.mxu0 0.0
    %1087 = vmatpush1.msra.mxu0 0.0
    %1088 = vmatprep.subr.mxu0 0.0
    %1089 = vmatpush1.msra.mxu0 0.0
    %1090 = vmatprep.subr.mxu0 0.0
    %1091 = vmatpush1.msra.mxu0 0.0
    %1092 = vmatprep.subr.mxu0 0.0
    %1093 = vmatpush1.msra.mxu0 0.0
    %1094 = vmatprep.subr.mxu0 0.0
    %1095 = vmatpush1.msra.mxu0 0.0
    %1096 = vmatprep.subr.mxu0 0.0
    %1097 = vmatpush1.msra.mxu0 0.0
    %1098 = vmatprep.subr.mxu0 0.0
    %1099 = vmatpush1.msra.mxu0 0.0
    %1100 = vmatprep.subr.mxu0 0.0
    %1101 = vmatpush1.msra.mxu0 0.0
    %1102 = vmatprep.subr.mxu0 0.0
    %1103 = vmatpush1.msra.mxu0 0.0
    %1104 = vmatprep.subr.mxu0 0.0
    %1105 = vmatpush1.msra.mxu0 0.0
    %1106 = vmatprep.subr.mxu0 0.0
    %1107 = vmatpush1.msra.mxu0 0.0
    %1108 = vmatprep.subr.mxu0 0.0
    %1109 = vmatpush1.msra.mxu0 0.0
    %1110 = vmatprep.subr.mxu0 0.0
    %1111 = vmatpush1.msra.mxu0 0.0
    %1112 = vmatprep.subr.mxu0 0.0
    %1113 = vmatpush1.msra.mxu0 0.0
    %1114 = vmatprep.subr.mxu0 0.0
    %1115 = vmatpush1.msra.mxu0 0.0
    %1116 = vmatprep.subr.mxu0 0.0
    %1117 = vmatpush1.msra.mxu0 0.0
    %1118 = vmatprep.subr.mxu0 0.0
    %1119 = vmatpush1.msra.mxu0 0.0
    %1120 = vmatprep.subr.mxu0 0.0
    %1121 = vmatpush1.msra.mxu0 0.0
    %1122 = vmatprep.mubr.f32.mxu0 0.0
    %1123 = vmatmul.mubr.f32.gmra.mrb[0].mxu0 %v1048
    %v1124 = vpop.f32.mrb[0].mxu0
    %v1125 = vadd.f32 0.0, %v1124
    %v1126 = vpop.f32.mrb[0].mxu0
    %v1127 = vadd.f32 0.0, %v1126
    %1128 = vdwg.mxu0
    %1129 = vmatprep.subr.mxu0 %v1056
    %1130 = vmatpush1.msra.mxu0 %v1054
    %1131 = vmatprep.subr.mxu0 0.0
    %1132 = vmatpush1.msra.mxu0 0.0
    %1133 = vmatprep.subr.mxu0 0.0
    %1134 = vmatpush1.msra.mxu0 0.0
    %1135 = vmatprep.subr.mxu0 0.0
    %1136 = vmatpush1.msra.mxu0 0.0
    %1137 = vmatprep.subr.mxu0 0.0
    %1138 = vmatpush1.msra.mxu0 0.0
    %1139 = vmatprep.subr.mxu0 0.0
    %1140 = vmatpush1.msra.mxu0 0.0
    %1141 = vmatprep.subr.mxu0 0.0
    %1142 = vmatpush1.msra.mxu0 0.0
    %1143 = vmatprep.subr.mxu0 0.0
    %1144 = vmatpush1.msra.mxu0 0.0
    %1145 = vmatprep.subr.mxu0 0.0
    %1146 = vmatpush1.msra.mxu0 0.0
    %1147 = vmatprep.subr.mxu0 0.0
    %1148 = vmatpush1.msra.mxu0 0.0
    %1149 = vmatprep.subr.mxu0 0.0
    %1150 = vmatpush1.msra.mxu0 0.0
    %1151 = vmatprep.subr.mxu0 0.0
    %1152 = vmatpush1.msra.mxu0 0.0
    %1153 = vmatprep.subr.mxu0 0.0
    %1154 = vmatpush1.msra.mxu0 0.0
    %1155 = vmatprep.subr.mxu0 0.0
    %1156 = vmatpush1.msra.mxu0 0.0
    %1157 = vmatprep.subr.mxu0 0.0
    %1158 = vmatpush1.msra.mxu0 0.0
    %1159 = vmatprep.subr.mxu0 0.0
    %1160 = vmatpush1.msra.mxu0 0.0
    %1161 = vmatprep.subr.mxu0 0.0
    %1162 = vmatpush1.msra.mxu0 0.0
    %1163 = vmatprep.subr.mxu0 0.0
    %1164 = vmatpush1.msra.mxu0 0.0
    %1165 = vmatprep.subr.mxu0 0.0
    %1166 = vmatpush1.msra.mxu0 0.0
    %1167 = vmatprep.subr.mxu0 0.0
    %1168 = vmatpush1.msra.mxu0 0.0
    %1169 = vmatprep.subr.mxu0 0.0
    %1170 = vmatpush1.msra.mxu0 0.0
    %1171 = vmatprep.subr.mxu0 0.0
    %1172 = vmatpush1.msra.mxu0 0.0
    %1173 = vmatprep.subr.mxu0 0.0
    %1174 = vmatpush1.msra.mxu0 0.0
    %1175 = vmatprep.subr.mxu0 0.0
    %1176 = vmatpush1.msra.mxu0 0.0
    %1177 = vmatprep.subr.mxu0 0.0
    %1178 = vmatpush1.msra.mxu0 0.0
    %1179 = vmatprep.subr.mxu0 0.0
    %1180 = vmatpush1.msra.mxu0 0.0
    %1181 = vmatprep.subr.mxu0 0.0
    %1182 = vmatpush1.msra.mxu0 0.0
    %1183 = vmatprep.subr.mxu0 0.0
    %1184 = vmatpush1.msra.mxu0 0.0
    %1185 = vmatprep.subr.mxu0 0.0
    %1186 = vmatpush1.msra.mxu0 0.0
    %1187 = vmatprep.subr.mxu0 0.0
    %1188 = vmatpush1.msra.mxu0 0.0
    %1189 = vmatprep.subr.mxu0 0.0
    %1190 = vmatpush1.msra.mxu0 0.0
    %1191 = vmatprep.subr.mxu0 0.0
    %1192 = vmatpush1.msra.mxu0 0.0
    %1193 = vmatprep.mubr.f32.mxu0 0.0
    %1194 = vmatmul.mubr.f32.gmra.mrb[0].mxu0 %v1048
    %v1195 = vpop.f32.mrb[0].mxu0
    %v1196 = vadd.f32 0.0, %v1195
    %v1197 = vpop.f32.mrb[0].mxu0
    %v1198 = vadd.f32 0.0, %v1197
    %1199 = vdwg.mxu0
    %v1200 = vadd.f32 %v1030, %v1125
    %v1201 = vadd.f32 %v1031, %v1127
    %v1202 = vadd.f32 %v1032, %v1196
    %v1203 = vadd.f32 %v1033, %v1198
    %1204 = vrot.lane.b32.xlu0 %v24, 95
    %v1205 = vpop.permute.xlu0 %1204
    %1206 = vrot.lane.b32.xlu0 %v26, 95
    %v1207 = vpop.permute.xlu0 %1206
    %vm1208 = vcmp.lt.s32.totalorder %v36, 95
    %v1209 = vsel %vm1208, %v1205, %v1207
    %v1210 = vsel %vm1208, %v1207, %v1205
    %v1213 = vrot.slane %v1209, 2
    %v1214 = vrot.slane %v1210, 2
    %s1215 = scalar_lea.vmem %s1, 56
    %v1216 = vld [vmem:[%s1215] sm:$0xff]
    %v1218 = vsel %vm46, %v1216, 0
    %v1220 = vsel %vm50, %v1209, 0
    %v1222 = vsel %vm50, %v1210, 0
    %v1224 = vsel %vm50, %v1213, 0
    %v1226 = vsel %vm50, %v1214, 0
    %1228 = vmatprep.subr.mxu0 %v1222
    %1229 = vmatpush1.msra.mxu0 %v1220
    %1230 = vmatprep.subr.mxu0 0.0
    %1231 = vmatpush1.msra.mxu0 0.0
    %1232 = vmatprep.subr.mxu0 0.0
    %1233 = vmatpush1.msra.mxu0 0.0
    %1234 = vmatprep.subr.mxu0 0.0
    %1235 = vmatpush1.msra.mxu0 0.0
    %1236 = vmatprep.subr.mxu0 0.0
    %1237 = vmatpush1.msra.mxu0 0.0
    %1238 = vmatprep.subr.mxu0 0.0
    %1239 = vmatpush1.msra.mxu0 0.0
    %1240 = vmatprep.subr.mxu0 0.0
    %1241 = vmatpush1.msra.mxu0 0.0
    %1242 = vmatprep.subr.mxu0 0.0
    %1243 = vmatpush1.msra.mxu0 0.0
    %1244 = vmatprep.subr.mxu0 0.0
    %1245 = vmatpush1.msra.mxu0 0.0
    %1246 = vmatprep.subr.mxu0 0.0
    %1247 = vmatpush1.msra.mxu0 0.0
    %1248 = vmatprep.subr.mxu0 0.0
    %1249 = vmatpush1.msra.mxu0 0.0
    %1250 = vmatprep.subr.mxu0 0.0
    %1251 = vmatpush1.msra.mxu0 0.0
    %1252 = vmatprep.subr.mxu0 0.0
    %1253 = vmatpush1.msra.mxu0 0.0
    %1254 = vmatprep.subr.mxu0 0.0
    %1255 = vmatpush1.msra.mxu0 0.0
    %1256 = vmatprep.subr.mxu0 0.0
    %1257 = vmatpush1.msra.mxu0 0.0
    %1258 = vmatprep.subr.mxu0 0.0
    %1259 = vmatpush1.msra.mxu0 0.0
    %1260 = vmatprep.subr.mxu0 0.0
    %1261 = vmatpush1.msra.mxu0 0.0
    %1262 = vmatprep.subr.mxu0 0.0
    %1263 = vmatpush1.msra.mxu0 0.0
    %1264 = vmatprep.subr.mxu0 0.0
    %1265 = vmatpush1.msra.mxu0 0.0
    %1266 = vmatprep.subr.mxu0 0.0
    %1267 = vmatpush1.msra.mxu0 0.0
    %1268 = vmatprep.subr.mxu0 0.0
    %1269 = vmatpush1.msra.mxu0 0.0
    %1270 = vmatprep.subr.mxu0 0.0
    %1271 = vmatpush1.msra.mxu0 0.0
    %1272 = vmatprep.subr.mxu0 0.0
    %1273 = vmatpush1.msra.mxu0 0.0
    %1274 = vmatprep.subr.mxu0 0.0
    %1275 = vmatpush1.msra.mxu0 0.0
    %1276 = vmatprep.subr.mxu0 0.0
    %1277 = vmatpush1.msra.mxu0 0.0
    %1278 = vmatprep.subr.mxu0 0.0
    %1279 = vmatpush1.msra.mxu0 0.0
    %1280 = vmatprep.subr.mxu0 0.0
    %1281 = vmatpush1.msra.mxu0 0.0
    %1282 = vmatprep.subr.mxu0 0.0
    %1283 = vmatpush1.msra.mxu0 0.0
    %1284 = vmatprep.subr.mxu0 0.0
    %1285 = vmatpush1.msra.mxu0 0.0
    %1286 = vmatprep.subr.mxu0 0.0
    %1287 = vmatpush1.msra.mxu0 0.0
    %1288 = vmatprep.subr.mxu0 0.0
    %1289 = vmatpush1.msra.mxu0 0.0
    %1290 = vmatprep.subr.mxu0 0.0
    %1291 = vmatpush1.msra.mxu0 0.0
    %1292 = vmatprep.mubr.f32.mxu0 0.0
    %1293 = vmatmul.mubr.f32.gmra.mrb[0].mxu0 %v1218
    %v1294 = vpop.f32.mrb[0].mxu0
    %v1295 = vadd.f32 0.0, %v1294
    %v1296 = vpop.f32.mrb[0].mxu0
    %v1297 = vadd.f32 0.0, %v1296
    %1298 = vdwg.mxu0
    %1299 = vmatprep.subr.mxu0 %v1226
    %1300 = vmatpush1.msra.mxu0 %v1224
    %1301 = vmatprep.subr.mxu0 0.0
    %1302 = vmatpush1.msra.mxu0 0.0
    %1303 = vmatprep.subr.mxu0 0.0
    %1304 = vmatpush1.msra.mxu0 0.0
    %1305 = vmatprep.subr.mxu0 0.0
    %1306 = vmatpush1.msra.mxu0 0.0
    %1307 = vmatprep.subr.mxu0 0.0
    %1308 = vmatpush1.msra.mxu0 0.0
    %1309 = vmatprep.subr.mxu0 0.0
    %1310 = vmatpush1.msra.mxu0 0.0
    %1311 = vmatprep.subr.mxu0 0.0
    %1312 = vmatpush1.msra.mxu0 0.0
    %1313 = vmatprep.subr.mxu0 0.0
    %1314 = vmatpush1.msra.mxu0 0.0
    %1315 = vmatprep.subr.mxu0 0.0
    %1316 = vmatpush1.msra.mxu0 0.0
    %1317 = vmatprep.subr.mxu0 0.0
    %1318 = vmatpush1.msra.mxu0 0.0
    %1319 = vmatprep.subr.mxu0 0.0
    %1320 = vmatpush1.msra.mxu0 0.0
    %1321 = vmatprep.subr.mxu0 0.0
    %1322 = vmatpush1.msra.mxu0 0.0
    %1323 = vmatprep.subr.mxu0 0.0
    %1324 = vmatpush1.msra.mxu0 0.0
    %1325 = vmatprep.subr.mxu0 0.0
    %1326 = vmatpush1.msra.mxu0 0.0
    %1327 = vmatprep.subr.mxu0 0.0
    %1328 = vmatpush1.msra.mxu0 0.0
    %1329 = vmatprep.subr.mxu0 0.0
    %1330 = vmatpush1.msra.mxu0 0.0
    %1331 = vmatprep.subr.mxu0 0.0
    %1332 = vmatpush1.msra.mxu0 0.0
    %1333 = vmatprep.subr.mxu0 0.0
    %1334 = vmatpush1.msra.mxu0 0.0
    %1335 = vmatprep.subr.mxu0 0.0
    %1336 = vmatpush1.msra.mxu0 0.0
    %1337 = vmatprep.subr.mxu0 0.0
    %1338 = vmatpush1.msra.mxu0 0.0
    %1339 = vmatprep.subr.mxu0 0.0
    %1340 = vmatpush1.msra.mxu0 0.0
    %1341 = vmatprep.subr.mxu0 0.0
    %1342 = vmatpush1.msra.mxu0 0.0
    %1343 = vmatprep.subr.mxu0 0.0
    %1344 = vmatpush1.msra.mxu0 0.0
    %1345 = vmatprep.subr.mxu0 0.0
    %1346 = vmatpush1.msra.mxu0 0.0
    %1347 = vmatprep.subr.mxu0 0.0
    %1348 = vmatpush1.msra.mxu0 0.0
    %1349 = vmatprep.subr.mxu0 0.0
    %1350 = vmatpush1.msra.mxu0 0.0
    %1351 = vmatprep.subr.mxu0 0.0
    %1352 = vmatpush1.msra.mxu0 0.0
    %1353 = vmatprep.subr.mxu0 0.0
    %1354 = vmatpush1.msra.mxu0 0.0
    %1355 = vmatprep.subr.mxu0 0.0
    %1356 = vmatpush1.msra.mxu0 0.0
    %1357 = vmatprep.subr.mxu0 0.0
    %1358 = vmatpush1.msra.mxu0 0.0
    %1359 = vmatprep.subr.mxu0 0.0
    %1360 = vmatpush1.msra.mxu0 0.0
    %1361 = vmatprep.subr.mxu0 0.0
    %1362 = vmatpush1.msra.mxu0 0.0
    %1363 = vmatprep.mubr.f32.mxu0 0.0
    %1364 = vmatmul.mubr.f32.gmra.mrb[0].mxu0 %v1218
    %v1365 = vpop.f32.mrb[0].mxu0
    %v1366 = vadd.f32 0.0, %v1365
    %v1367 = vpop.f32.mrb[0].mxu0
    %v1368 = vadd.f32 0.0, %v1367
    %1369 = vdwg.mxu0
    %v1370 = vadd.f32 %v1200, %v1295
    %v1371 = vadd.f32 %v1201, %v1297
    %v1372 = vadd.f32 %v1202, %v1366
    %v1373 = vadd.f32 %v1203, %v1368
    %1374 = vrot.lane.b32.xlu0 %v24, 94
    %v1375 = vpop.permute.xlu0 %1374
    %1376 = vrot.lane.b32.xlu0 %v26, 94
    %v1377 = vpop.permute.xlu0 %1376
    %vm1378 = vcmp.lt.s32.totalorder %v36, 94
    %v1379 = vsel %vm1378, %v1375, %v1377
    %v1380 = vsel %vm1378, %v1377, %v1375
    %v1383 = vrot.slane %v1379, 2
    %v1384 = vrot.slane %v1380, 2
    %s1385 = scalar_lea.vmem %s1, 64
    %v1386 = vld [vmem:[%s1385] sm:$0xff]
    %v1388 = vsel %vm46, %v1386, 0
    %v1390 = vsel %vm50, %v1379, 0
    %v1392 = vsel %vm50, %v1380, 0
    %v1394 = vsel %vm50, %v1383, 0
    %v1396 = vsel %vm50, %v1384, 0
    %1398 = vmatprep.subr.mxu0 %v1392
    %1399 = vmatpush1.msra.mxu0 %v1390
    %1400 = vmatprep.subr.mxu0 0.0
    %1401 = vmatpush1.msra.mxu0 0.0
    %1402 = vmatprep.subr.mxu0 0.0
    %1403 = vmatpush1.msra.mxu0 0.0
    %1404 = vmatprep.subr.mxu0 0.0
    %1405 = vmatpush1.msra.mxu0 0.0
    %1406 = vmatprep.subr.mxu0 0.0
    %1407 = vmatpush1.msra.mxu0 0.0
    %1408 = vmatprep.subr.mxu0 0.0
    %1409 = vmatpush1.msra.mxu0 0.0
    %1410 = vmatprep.subr.mxu0 0.0
    %1411 = vmatpush1.msra.mxu0 0.0
    %1412 = vmatprep.subr.mxu0 0.0
    %1413 = vmatpush1.msra.mxu0 0.0
    %1414 = vmatprep.subr.mxu0 0.0
    %1415 = vmatpush1.msra.mxu0 0.0
    %1416 = vmatprep.subr.mxu0 0.0
    %1417 = vmatpush1.msra.mxu0 0.0
    %1418 = vmatprep.subr.mxu0 0.0
    %1419 = vmatpush1.msra.mxu0 0.0
    %1420 = vmatprep.subr.mxu0 0.0
    %1421 = vmatpush1.msra.mxu0 0.0
    %1422 = vmatprep.subr.mxu0 0.0
    %1423 = vmatpush1.msra.mxu0 0.0
    %1424 = vmatprep.subr.mxu0 0.0
    %1425 = vmatpush1.msra.mxu0 0.0
    %1426 = vmatprep.subr.mxu0 0.0
    %1427 = vmatpush1.msra.mxu0 0.0
    %1428 = vmatprep.subr.mxu0 0.0
    %1429 = vmatpush1.msra.mxu0 0.0
    %1430 = vmatprep.subr.mxu0 0.0
    %1431 = vmatpush1.msra.mxu0 0.0
    %1432 = vmatprep.subr.mxu0 0.0
    %1433 = vmatpush1.msra.mxu0 0.0
    %1434 = vmatprep.subr.mxu0 0.0
    %1435 = vmatpush1.msra.mxu0 0.0
    %1436 = vmatprep.subr.mxu0 0.0
    %1437 = vmatpush1.msra.mxu0 0.0
    %1438 = vmatprep.subr.mxu0 0.0
    %1439 = vmatpush1.msra.mxu0 0.0
    %1440 = vmatprep.subr.mxu0 0.0
    %1441 = vmatpush1.msra.mxu0 0.0
    %1442 = vmatprep.subr.mxu0 0.0
    %1443 = vmatpush1.msra.mxu0 0.0
    %1444 = vmatprep.subr.mxu0 0.0
    %1445 = vmatpush1.msra.mxu0 0.0
    %1446 = vmatprep.subr.mxu0 0.0
    %1447 = vmatpush1.msra.mxu0 0.0
    %1448 = vmatprep.subr.mxu0 0.0
    %1449 = vmatpush1.msra.mxu0 0.0
    %1450 = vmatprep.subr.mxu0 0.0
    %1451 = vmatpush1.msra.mxu0 0.0
    %1452 = vmatprep.subr.mxu0 0.0
    %1453 = vmatpush1.msra.mxu0 0.0
    %1454 = vmatprep.subr.mxu0 0.0
    %1455 = vmatpush1.msra.mxu0 0.0
    %1456 = vmatprep.subr.mxu0 0.0
    %1457 = vmatpush1.msra.mxu0 0.0
    %1458 = vmatprep.subr.mxu0 0.0
    %1459 = vmatpush1.msra.mxu0 0.0
    %1460 = vmatprep.subr.mxu0 0.0
    %1461 = vmatpush1.msra.mxu0 0.0
    %1462 = vmatprep.mubr.f32.mxu0 0.0
    %1463 = vmatmul.mubr.f32.gmra.mrb[0].mxu0 %v1388
    %v1464 = vpop.f32.mrb[0].mxu0
    %v1465 = vadd.f32 0.0, %v1464
    %v1466 = vpop.f32.mrb[0].mxu0
    %v1467 = vadd.f32 0.0, %v1466
    %1468 = vdwg.mxu0
    %1469 = vmatprep.subr.mxu0 %v1396
    %1470 = vmatpush1.msra.mxu0 %v1394
    %1471 = vmatprep.subr.mxu0 0.0
    %1472 = vmatpush1.msra.mxu0 0.0
    %1473 = vmatprep.subr.mxu0 0.0
    %1474 = vmatpush1.msra.mxu0 0.0
    %1475 = vmatprep.subr.mxu0 0.0
    %1476 = vmatpush1.msra.mxu0 0.0
    %1477 = vmatprep.subr.mxu0 0.0
    %1478 = vmatpush1.msra.mxu0 0.0
    %1479 = vmatprep.subr.mxu0 0.0
    %1480 = vmatpush1.msra.mxu0 0.0
    %1481 = vmatprep.subr.mxu0 0.0
    %1482 = vmatpush1.msra.mxu0 0.0
    %1483 = vmatprep.subr.mxu0 0.0
    %1484 = vmatpush1.msra.mxu0 0.0
    %1485 = vmatprep.subr.mxu0 0.0
    %1486 = vmatpush1.msra.mxu0 0.0
    %1487 = vmatprep.subr.mxu0 0.0
    %1488 = vmatpush1.msra.mxu0 0.0
    %1489 = vmatprep.subr.mxu0 0.0
    %1490 = vmatpush1.msra.mxu0 0.0
    %1491 = vmatprep.subr.mxu0 0.0
    %1492 = vmatpush1.msra.mxu0 0.0
    %1493 = vmatprep.subr.mxu0 0.0
    %1494 = vmatpush1.msra.mxu0 0.0
    %1495 = vmatprep.subr.mxu0 0.0
    %1496 = vmatpush1.msra.mxu0 0.0
    %1497 = vmatprep.subr.mxu0 0.0
    %1498 = vmatpush1.msra.mxu0 0.0
    %1499 = vmatprep.subr.mxu0 0.0
    %1500 = vmatpush1.msra.mxu0 0.0
    %1501 = vmatprep.subr.mxu0 0.0
    %1502 = vmatpush1.msra.mxu0 0.0
    %1503 = vmatprep.subr.mxu0 0.0
    %1504 = vmatpush1.msra.mxu0 0.0
    %1505 = vmatprep.subr.mxu0 0.0
    %1506 = vmatpush1.msra.mxu0 0.0
    %1507 = vmatprep.subr.mxu0 0.0
    %1508 = vmatpush1.msra.mxu0 0.0
    %1509 = vmatprep.subr.mxu0 0.0
    %1510 = vmatpush1.msra.mxu0 0.0
    %1511 = vmatprep.subr.mxu0 0.0
    %1512 = vmatpush1.msra.mxu0 0.0
    %1513 = vmatprep.subr.mxu0 0.0
    %1514 = vmatpush1.msra.mxu0 0.0
    %1515 = vmatprep.subr.mxu0 0.0
    %1516 = vmatpush1.msra.mxu0 0.0
    %1517 = vmatprep.subr.mxu0 0.0
    %1518 = vmatpush1.msra.mxu0 0.0
    %1519 = vmatprep.subr.mxu0 0.0
    %1520 = vmatpush1.msra.mxu0 0.0
    %1521 = vmatprep.subr.mxu0 0.0
    %1522 = vmatpush1.msra.mxu0 0.0
    %1523 = vmatprep.subr.mxu0 0.0
    %1524 = vmatpush1.msra.mxu0 0.0
    %1525 = vmatprep.subr.mxu0 0.0
    %1526 = vmatpush1.msra.mxu0 0.0
    %1527 = vmatprep.subr.mxu0 0.0
    %1528 = vmatpush1.msra.mxu0 0.0
    %1529 = vmatprep.subr.mxu0 0.0
    %1530 = vmatpush1.msra.mxu0 0.0
    %1531 = vmatprep.subr.mxu0 0.0
    %1532 = vmatpush1.msra.mxu0 0.0
    %1533 = vmatprep.mubr.f32.mxu0 0.0
    %1534 = vmatmul.mubr.f32.gmra.mrb[0].mxu0 %v1388
    %v1535 = vpop.f32.mrb[0].mxu0
    %v1536 = vadd.f32 0.0, %v1535
    %v1537 = vpop.f32.mrb[0].mxu0
    %v1538 = vadd.f32 0.0, %v1537
    %1539 = vdwg.mxu0
    %v1540 = vadd.f32 %v1370, %v1465
    %v1541 = vadd.f32 %v1371, %v1467
    %v1542 = vadd.f32 %v1372, %v1536
    %v1543 = vadd.f32 %v1373, %v1538
    %v1544 = vld [vmem:[%s2] sm:$0xff]
    %1546 = vset.pattern.permute.xlu0 0
    %1547 = vperm.xlu0 %1546, %v1544
    %v1548 = vpop.permute.xlu0 %1547
    %v1550 = vadd.f32 %v1540, %v1548
    %v1551 = vadd.f32 %v1541, %v1548
    %v1552 = vadd.f32 %v1542, %v1548
    %v1553 = vadd.f32 %v1543, %v1548
    %v1554 = vmax.f32 %v1550, 0.0
    %v1555 = vmax.f32 %v1551, 0.0
    %v1556 = vmax.f32 %v1552, 0.0
    %v1557 = vmax.f32 %v1553, 0.0
    %v1558 = vld [vmem:[%s5] sm:$0xf]
    %v1560 = vlaneseq
    %v1561 = vshrl.u32 %v1560, 7
    %v1562 = vsub.s32 0, %v1561
    %v1563 = vrot.slane %v1558, %v1562
    %v1564 = vlaneseq
    %v1565 = vshrl.u32 %v1564, 7
    %v1566 = vsub.s32 1, %v1565
    %v1567 = vrot.slane %v1558, %v1566
    %v1568 = vlaneseq
    %v1569 = vshrl.u32 %v1568, 7
    %v1570 = vsub.s32 2, %v1569
    %v1571 = vrot.slane %v1558, %v1570
    %v1572 = vlaneseq
    %v1573 = vshrl.u32 %v1572, 7
    %v1574 = vsub.s32 3, %v1573
    %v1575 = vrot.slane %v1558, %v1574
    %v1580 = vmul.f32 %v1554, %v1563
    %v1581 = vmul.f32 %v1555, %v1567
    %v1582 = vmul.f32 %v1556, %v1571
    %v1583 = vmul.f32 %v1557, %v1575
    %v1584 = vmax.f32 %v1580, %v1581
    %1585 = vmax.xlane.f32.xlu0 %v1584
    %v1586 = vpop.xlane.xlu0 %1585
    %v1587 = vmax.f32 %v1582, %v1583
    %1588 = vmax.xlane.f32.xlu0 %v1587
    %v1589 = vpop.xlane.xlu0 %1588
    %vm1590 = vcmask 7168
    %v1591 = vsel %vm1590, %v1586, %v1589
    %v1592 = vld [vmem:[%s3] sm:$0xff]
    %v1593 = vld [vmem:[%s4] sm:$0xff]
    %1595 = vset.pattern.permute.xlu0 0
    %1596 = vperm.xlu0 %1595, %v1593
    %v1597 = vpop.permute.xlu0 %1596
    %vm1599 = vcmask 64512
    %v1601 = vsel %vm1599, %v1592, 0
    %1603 = vmatprep.subr.mxu0 0.0
    %1604 = vmatpush1.msra.mxu0 %v1591
    %1605 = vmatprep.subr.mxu0 0.0
    %1606 = vmatpush1.msra.mxu0 0.0
    %1607 = vmatprep.subr.mxu0 0.0
    %1608 = vmatpush1.msra.mxu0 0.0
    %1609 = vmatprep.subr.mxu0 0.0
    %1610 = vmatpush1.msra.mxu0 0.0
    %1611 = vmatprep.subr.mxu0 0.0
    %1612 = vmatpush1.msra.mxu0 0.0
    %1613 = vmatprep.subr.mxu0 0.0
    %1614 = vmatpush1.msra.mxu0 0.0
    %1615 = vmatprep.subr.mxu0 0.0
    %1616 = vmatpush1.msra.mxu0 0.0
    %1617 = vmatprep.subr.mxu0 0.0
    %1618 = vmatpush1.msra.mxu0 0.0
    %1619 = vmatprep.subr.mxu0 0.0
    %1620 = vmatpush1.msra.mxu0 0.0
    %1621 = vmatprep.subr.mxu0 0.0
    %1622 = vmatpush1.msra.mxu0 0.0
    %1623 = vmatprep.subr.mxu0 0.0
    %1624 = vmatpush1.msra.mxu0 0.0
    %1625 = vmatprep.subr.mxu0 0.0
    %1626 = vmatpush1.msra.mxu0 0.0
    %1627 = vmatprep.subr.mxu0 0.0
    %1628 = vmatpush1.msra.mxu0 0.0
    %1629 = vmatprep.subr.mxu0 0.0
    %1630 = vmatpush1.msra.mxu0 0.0
    %1631 = vmatprep.subr.mxu0 0.0
    %1632 = vmatpush1.msra.mxu0 0.0
    %1633 = vmatprep.subr.mxu0 0.0
    %1634 = vmatpush1.msra.mxu0 0.0
    %1635 = vmatprep.subr.mxu0 0.0
    %1636 = vmatpush1.msra.mxu0 0.0
    %1637 = vmatprep.subr.mxu0 0.0
    %1638 = vmatpush1.msra.mxu0 0.0
    %1639 = vmatprep.subr.mxu0 0.0
    %1640 = vmatpush1.msra.mxu0 0.0
    %1641 = vmatprep.subr.mxu0 0.0
    %1642 = vmatpush1.msra.mxu0 0.0
    %1643 = vmatprep.subr.mxu0 0.0
    %1644 = vmatpush1.msra.mxu0 0.0
    %1645 = vmatprep.subr.mxu0 0.0
    %1646 = vmatpush1.msra.mxu0 0.0
    %1647 = vmatprep.subr.mxu0 0.0
    %1648 = vmatpush1.msra.mxu0 0.0
    %1649 = vmatprep.subr.mxu0 0.0
    %1650 = vmatpush1.msra.mxu0 0.0
    %1651 = vmatprep.subr.mxu0 0.0
    %1652 = vmatpush1.msra.mxu0 0.0
    %1653 = vmatprep.subr.mxu0 0.0
    %1654 = vmatpush1.msra.mxu0 0.0
    %1655 = vmatprep.subr.mxu0 0.0
    %1656 = vmatpush1.msra.mxu0 0.0
    %1657 = vmatprep.subr.mxu0 0.0
    %1658 = vmatpush1.msra.mxu0 0.0
    %1659 = vmatprep.subr.mxu0 0.0
    %1660 = vmatpush1.msra.mxu0 0.0
    %1661 = vmatprep.subr.mxu0 0.0
    %1662 = vmatpush1.msra.mxu0 0.0
    %1663 = vmatprep.subr.mxu0 0.0
    %1664 = vmatpush1.msra.mxu0 0.0
    %1665 = vmatprep.subr.mxu0 0.0
    %1666 = vmatpush1.msra.mxu0 0.0
    %1667 = vmatprep.mubr.f32.mxu0 0.0
    %1668 = vmatmul.mubr.f32.gmra.mrb[0].mxu0 %v1601
    %v1669 = vpop.f32.mrb[0].mxu0
    %v1670 = vadd.f32 %v1597, %v1669
    %v1671 = vpop.f32.mrb[0].mxu0
    %1672 = vdwg.mxu0
    %v1673 = vsel %vm46, %v1670, -inf
    %1674 = vmax.xlane.f32.xlu0 %v1673
    %v1675 = vpop.xlane.xlu0 %1674
    %v1676 = vrot.slane %v1675, 4
    %v1677 = vmax.f32 %v1675, %v1676
    %v1678 = vrot.slane %v1677, 2
    %v1679 = vmax.f32 %v1677, %v1678
    %v1680 = vrot.slane %v1679, 1
    %v1681 = vmax.f32 %v1679, %v1680
    %s1682 = vtos %v1681
    %p1683 = scmp.lt.f32.partialorder %s1682, 0.0
    %v1684 = vadd.f32 %v1670, 1.0
    %s1685 = scalar_select %p1683, 1, 0
    %v1686 = vstv %s1685
    %vm1687 = vcmp.eq.s32.totalorder %v1686, 1
    %v1688 = vsel %vm1687, %v1684, %v1670
    %s1689 = scalar_lea.vmem %s3, 8
    %v1690 = vld [vmem:[%s1689] sm:$0xff]
    %s1691 = scalar_lea.vmem %s4, 8
    %v1692 = vld [vmem:[%s1691] sm:$0xff]
    %1694 = vset.pattern.permute.xlu0 0
    %1695 = vperm.xlu0 %1694, %v1692
    %v1696 = vpop.permute.xlu0 %1695
    %v1699 = vsel %vm1599, %v1690, 0
    %1701 = vmatprep.subr.mxu0 0.0
    %1702 = vmatpush1.msra.mxu0 %v1688
    %1703 = vmatprep.subr.mxu0 0.0
    %1704 = vmatpush1.msra.mxu0 0.0
    %1705 = vmatprep.subr.mxu0 0.0
    %1706 = vmatpush1.msra.mxu0 0.0
    %1707 = vmatprep.subr.mxu0 0.0
    %1708 = vmatpush1.msra.mxu0 0.0
    %1709 = vmatprep.subr.mxu0 0.0
    %1710 = vmatpush1.msra.mxu0 0.0
    %1711 = vmatprep.subr.mxu0 0.0
    %1712 = vmatpush1.msra.mxu0 0.0
    %1713 = vmatprep.subr.mxu0 0.0
    %1714 = vmatpush1.msra.mxu0 0.0
    %1715 = vmatprep.subr.mxu0 0.0
    %1716 = vmatpush1.msra.mxu0 0.0
    %1717 = vmatprep.subr.mxu0 0.0
    %1718 = vmatpush1.msra.mxu0 0.0
    %1719 = vmatprep.subr.mxu0 0.0
    %1720 = vmatpush1.msra.mxu0 0.0
    %1721 = vmatprep.subr.mxu0 0.0
    %1722 = vmatpush1.msra.mxu0 0.0
    %1723 = vmatprep.subr.mxu0 0.0
    %1724 = vmatpush1.msra.mxu0 0.0
    %1725 = vmatprep.subr.mxu0 0.0
    %1726 = vmatpush1.msra.mxu0 0.0
    %1727 = vmatprep.subr.mxu0 0.0
    %1728 = vmatpush1.msra.mxu0 0.0
    %1729 = vmatprep.subr.mxu0 0.0
    %1730 = vmatpush1.msra.mxu0 0.0
    %1731 = vmatprep.subr.mxu0 0.0
    %1732 = vmatpush1.msra.mxu0 0.0
    %1733 = vmatprep.subr.mxu0 0.0
    %1734 = vmatpush1.msra.mxu0 0.0
    %1735 = vmatprep.subr.mxu0 0.0
    %1736 = vmatpush1.msra.mxu0 0.0
    %1737 = vmatprep.subr.mxu0 0.0
    %1738 = vmatpush1.msra.mxu0 0.0
    %1739 = vmatprep.subr.mxu0 0.0
    %1740 = vmatpush1.msra.mxu0 0.0
    %1741 = vmatprep.subr.mxu0 0.0
    %1742 = vmatpush1.msra.mxu0 0.0
    %1743 = vmatprep.subr.mxu0 0.0
    %1744 = vmatpush1.msra.mxu0 0.0
    %1745 = vmatprep.subr.mxu0 0.0
    %1746 = vmatpush1.msra.mxu0 0.0
    %1747 = vmatprep.subr.mxu0 0.0
    %1748 = vmatpush1.msra.mxu0 0.0
    %1749 = vmatprep.subr.mxu0 0.0
    %1750 = vmatpush1.msra.mxu0 0.0
    %1751 = vmatprep.subr.mxu0 0.0
    %1752 = vmatpush1.msra.mxu0 0.0
    %1753 = vmatprep.subr.mxu0 0.0
    %1754 = vmatpush1.msra.mxu0 0.0
    %1755 = vmatprep.subr.mxu0 0.0
    %1756 = vmatpush1.msra.mxu0 0.0
    %1757 = vmatprep.subr.mxu0 0.0
    %1758 = vmatpush1.msra.mxu0 0.0
    %1759 = vmatprep.subr.mxu0 0.0
    %1760 = vmatpush1.msra.mxu0 0.0
    %1761 = vmatprep.subr.mxu0 0.0
    %1762 = vmatpush1.msra.mxu0 0.0
    %1763 = vmatprep.subr.mxu0 0.0
    %1764 = vmatpush1.msra.mxu0 0.0
    %1765 = vmatprep.mubr.f32.mxu0 0.0
    %1766 = vmatmul.mubr.f32.gmra.mrb[0].mxu0 %v1699
    %v1767 = vpop.f32.mrb[0].mxu0
    %v1768 = vadd.f32 %v1696, %v1767
    %v1769 = vpop.f32.mrb[0].mxu0
    %1770 = vdwg.mxu0
    %v1771 = vmax.f32 %v1768, 0.0
    %s1772 = scalar_lea.vmem %s3, 16
    %v1773 = vld [vmem:[%s1772] sm:$0xff]
    %s1774 = scalar_lea.vmem %s4, 16
    %v1775 = vld [vmem:[%s1774] sm:$0xff]
    %1777 = vset.pattern.permute.xlu0 0
    %1778 = vperm.xlu0 %1777, %v1775
    %v1779 = vpop.permute.xlu0 %1778
    %v1782 = vsel %vm1599, %v1773, 0
    %1784 = vmatprep.subr.mxu0 0.0
    %1785 = vmatpush1.msra.mxu0 %v1771
    %1786 = vmatprep.subr.mxu0 0.0
    %1787 = vmatpush1.msra.mxu0 0.0
    %1788 = vmatprep.subr.mxu0 0.0
    %1789 = vmatpush1.msra.mxu0 0.0
    %1790 = vmatprep.subr.mxu0 0.0
    %1791 = vmatpush1.msra.mxu0 0.0
    %1792 = vmatprep.subr.mxu0 0.0
    %1793 = vmatpush1.msra.mxu0 0.0
    %1794 = vmatprep.subr.mxu0 0.0
    %1795 = vmatpush1.msra.mxu0 0.0
    %1796 = vmatprep.subr.mxu0 0.0
    %1797 = vmatpush1.msra.mxu0 0.0
    %1798 = vmatprep.subr.mxu0 0.0
    %1799 = vmatpush1.msra.mxu0 0.0
    %1800 = vmatprep.subr.mxu0 0.0
    %1801 = vmatpush1.msra.mxu0 0.0
    %1802 = vmatprep.subr.mxu0 0.0
    %1803 = vmatpush1.msra.mxu0 0.0
    %1804 = vmatprep.subr.mxu0 0.0
    %1805 = vmatpush1.msra.mxu0 0.0
    %1806 = vmatprep.subr.mxu0 0.0
    %1807 = vmatpush1.msra.mxu0 0.0
    %1808 = vmatprep.subr.mxu0 0.0
    %1809 = vmatpush1.msra.mxu0 0.0
    %1810 = vmatprep.subr.mxu0 0.0
    %1811 = vmatpush1.msra.mxu0 0.0
    %1812 = vmatprep.subr.mxu0 0.0
    %1813 = vmatpush1.msra.mxu0 0.0
    %1814 = vmatprep.subr.mxu0 0.0
    %1815 = vmatpush1.msra.mxu0 0.0
    %1816 = vmatprep.subr.mxu0 0.0
    %1817 = vmatpush1.msra.mxu0 0.0
    %1818 = vmatprep.subr.mxu0 0.0
    %1819 = vmatpush1.msra.mxu0 0.0
    %1820 = vmatprep.subr.mxu0 0.0
    %1821 = vmatpush1.msra.mxu0 0.0
    %1822 = vmatprep.subr.mxu0 0.0
    %1823 = vmatpush1.msra.mxu0 0.0
    %1824 = vmatprep.subr.mxu0 0.0
    %1825 = vmatpush1.msra.mxu0 0.0
    %1826 = vmatprep.subr.mxu0 0.0
    %1827 = vmatpush1.msra.mxu0 0.0
    %1828 = vmatprep.subr.mxu0 0.0
    %1829 = vmatpush1.msra.mxu0 0.0
    %1830 = vmatprep.subr.mxu0 0.0
    %1831 = vmatpush1.msra.mxu0 0.0
    %1832 = vmatprep.subr.mxu0 0.0
    %1833 = vmatpush1.msra.mxu0 0.0
    %1834 = vmatprep.subr.mxu0 0.0
    %1835 = vmatpush1.msra.mxu0 0.0
    %1836 = vmatprep.subr.mxu0 0.0
    %1837 = vmatpush1.msra.mxu0 0.0
    %1838 = vmatprep.subr.mxu0 0.0
    %1839 = vmatpush1.msra.mxu0 0.0
    %1840 = vmatprep.subr.mxu0 0.0
    %1841 = vmatpush1.msra.mxu0 0.0
    %1842 = vmatprep.subr.mxu0 0.0
    %1843 = vmatpush1.msra.mxu0 0.0
    %1844 = vmatprep.subr.mxu0 0.0
    %1845 = vmatpush1.msra.mxu0 0.0
    %1846 = vmatprep.subr.mxu0 0.0
    %1847 = vmatpush1.msra.mxu0 0.0
    %1848 = vmatprep.mubr.f32.mxu0 0.0
    %1849 = vmatmul.mubr.f32.gmra.mrb[0].mxu0 %v1782
    %v1850 = vpop.f32.mrb[0].mxu0
    %v1851 = vadd.f32 %v1779, %v1850
    %v1852 = vpop.f32.mrb[0].mxu0
    %1853 = vdwg.mxu0
    %1854 = vxpose.xlu0.b32.start [1/16] %v1851, 128
    %1855 = vxpose.xlu0.b32.cont [2/16] 0.0, 128
    %1856 = vxpose.xlu0.b32.cont [3/16] 0.0, 128
    %1857 = vxpose.xlu0.b32.cont [4/16] 0.0, 128
    %1858 = vxpose.xlu0.b32.cont [5/16] 0.0, 128
    %1859 = vxpose.xlu0.b32.cont [6/16] 0.0, 128
    %1860 = vxpose.xlu0.b32.cont [7/16] 0.0, 128
    %1861 = vxpose.xlu0.b32.cont [8/16] 0.0, 128
    %1862 = vxpose.xlu0.b32.cont [9/16] 0.0, 128
    %1863 = vxpose.xlu0.b32.cont [10/16] 0.0, 128
    %1864 = vxpose.xlu0.b32.cont [11/16] 0.0, 128
    %1865 = vxpose.xlu0.b32.cont [12/16] 0.0, 128
    %1866 = vxpose.xlu0.b32.cont [13/16] 0.0, 128
    %1867 = vxpose.xlu0.b32.cont [14/16] 0.0, 128
    %1868 = vxpose.xlu0.b32.cont [15/16] 0.0, 128
    %1869 = vxpose.xlu0.b32.end [16/16] 0.0, 128
    %v1870 = vpop.trf.xlu0
    %v1871 = vpop.trf.xlu0
    %v1872 = vpop.trf.xlu0
    %v1873 = vpop.trf.xlu0
    %v1874 = vpop.trf.xlu0
    %v1875 = vpop.trf.xlu0
    %v1876 = vpop.trf.xlu0
    %v1877 = vpop.trf.xlu0
    %v1878 = vpop.trf.xlu0
    %v1879 = vpop.trf.xlu0
    %v1880 = vpop.trf.xlu0
    %v1881 = vpop.trf.xlu0
    %v1882 = vpop.trf.xlu0
    %v1883 = vpop.trf.xlu0
    %v1884 = vpop.trf.xlu0
    %v1885 = vpop.trf.xlu0
    %vm1886 = vcmask 58368
    %1887 = vst.msk [vmem:[#allocation2] sm:$0x3] %vm1886, %v1870
    // Predicated region
    $region26: #{untraceable_simple_module.1} parent=1 // pred_check
      _
    $region27: #{untraceable_simple_module.1} parent=1 // pred_check_branch
      %1889 = sbr.rel (0) target = $region29
    $region28: #{untraceable_simple_module.1} parent=1 // pred_region
      %s1891 = ssub.s32 32, 32
      %1892 = vsyncadd [#allocation3], %s1891
      %s1894 = sshll.u32 [#allocation2], 4
      %s1895 = int_to_ptr.vmem [resolvable:$true] %s1894
      %1897 = dma.vmem_to_hbm [thread:$0]  %s1895, 32, %s6, [#allocation3]
    $region29: #{untraceable_simple_module.1} parent=1 // pred_fallthru
      _
    // Predicated region
    $region30: #{untraceable_simple_module.1} parent=1 // pred_check
      _
    $region31: #{untraceable_simple_module.1} parent=1 // pred_check_branch
      %1899 = sbr.rel (0) target = $region33
    $region32: #{untraceable_simple_module.1} parent=1 // pred_region
      %1900 = dma.done [#allocation3], 32
    $region33: #{untraceable_simple_module.1} parent=1 // pred_fallthru
      _
    %1901 = vsyncpa [#allocation3], 1

</llo_original>
